<compile_context>
chip_gen: v5e
topology: v5e:2x2
jax: 0.10.0
libtpu: 0.0.40
codegen_flags: <defaults>
</compile_context>

<pallas_src>
import functools

import jax
import jax.numpy as jnp
from jax import lax
from jax.experimental import pallas as pl
from jax.experimental.pallas import tpu as pltpu

EPS = 1e-5
NEG_SLOPE = 0.2


def _conv_block_kernel(x_ref, w1_ref, w2_ref, wid_ref, o_ref,
                       xpad_ref, ypad_ref, col1_ref, col2_ref,
                       *, H, W, cin, cout):
    # x_ref:   (1, Cin, H*W)    f32  input image, channels on sublanes, H*W on lanes
    # w1_ref:  (Cout, 9*Cin)    bf16 conv1 weights, K ordered (dy, dx, ci)
    # w2_ref:  (Cout, 9*Cout)   bf16 conv2 weights
    # wid_ref: (Cout, Cin)      bf16 identity 1x1 conv weights
    # o_ref:   (1, Cout, H*W)   f32  output
    # xpad_ref: VMEM (Cin,  H*W + 2*(W+1)) f32  zero-padded flat input
    # ypad_ref: VMEM (Cout, H*W + 2*(W+1)) f32  zero-padded flat intermediate
    # col1_ref: VMEM (9*Cin,  H*W) f32  im2col matrix for conv1
    # col2_ref: VMEM (9*Cout, H*W) f32  im2col matrix for conv2
    HW = H * W
    PAD = W + 1  # enough zeros for the largest flat tap shift |(dy-1)*W + (dx-1)|

    # Image-edge masks shared by both 3x3 convs: a tap with dx offset -1 must
    # not read across the left image edge (and +1 across the right edge).
    col_ids = lax.broadcasted_iota(jnp.int32, (1, HW), 1) % W
    not_left = col_ids != 0
    not_right = col_ids != (W - 1)

    def im2col(src_ref, col_ref, c):
        # src_ref holds [PAD zeros | flat image | PAD zeros] per channel row.
        # Tap (dy, dx) of a pad=1 3x3 conv is the flat image shifted by
        # s = (dy-1)*W + (dx-1); row wrap-around at the left/right image edge
        # is fixed up with the masks above.
        for dy in range(3):
            for dx in range(3):
                s = (dy - 1) * W + (dx - 1)
                patch = src_ref[:, PAD + s:PAD + s + HW]          # (c, HW)
                if dx == 0:
                    patch = jnp.where(not_left, patch, 0.0)
                elif dx == 2:
                    patch = jnp.where(not_right, patch, 0.0)
                k = dy * 3 + dx
                col_ref[k * c:(k + 1) * c, :] = patch

    def instance_norm_lrelu(acc):
        # One-pass per-channel stats over the spatial (lane) axis, f32 math,
        # biased variance + eps=1e-5 (torch InstanceNorm2d defaults), then
        # LeakyReLU(0.2).  rsqrt lands on the EUP slot.
        inv_n = 1.0 / HW
        mean = jnp.sum(acc, axis=1, keepdims=True) * inv_n
        ex2 = jnp.sum(acc * acc, axis=1, keepdims=True) * inv_n
        var = jnp.maximum(ex2 - mean * mean, 0.0)
        y = (acc - mean) * lax.rsqrt(var + EPS)
        return jnp.where(y > 0, y, NEG_SLOPE * y)

    x = x_ref[0]                                                   # (Cin, HW) f32

    # ---- conv1: place flat image in the padded scratch, build im2col, one
    #      bf16 MXU matmul with f32 accumulation.
    xpad_ref[:, 0:PAD] = jnp.zeros((cin, PAD), jnp.float32)
    xpad_ref[:, PAD + HW:PAD + HW + PAD] = jnp.zeros((cin, PAD), jnp.float32)
    xpad_ref[:, PAD:PAD + HW] = x
    im2col(xpad_ref, col1_ref, cin)
    acc1 = jnp.dot(w1_ref[...], col1_ref[...].astype(jnp.bfloat16),
                   preferred_element_type=jnp.float32)             # (Cout, HW)
    y1 = instance_norm_lrelu(acc1)
    # TODO(synk): Dropout2d is the identity here (eval / drop_prob == 0).

    # ---- conv2 (same structure on the intermediate activation)
    ypad_ref[:, 0:PAD] = jnp.zeros((cout, PAD), jnp.float32)
    ypad_ref[:, PAD + HW:PAD + HW + PAD] = jnp.zeros((cout, PAD), jnp.float32)
    ypad_ref[:, PAD:PAD + HW] = y1
    im2col(ypad_ref, col2_ref, cout)
    acc2 = jnp.dot(w2_ref[...], col2_ref[...].astype(jnp.bfloat16),
                   preferred_element_type=jnp.float32)             # (Cout, HW)
    y2 = instance_norm_lrelu(acc2)

    # ---- identity 1x1 conv + residual add + out LeakyReLU (f32)
    ident = jnp.dot(wid_ref[...], x.astype(jnp.bfloat16),
                    preferred_element_type=jnp.float32)            # (Cout, HW)
    out = y2 + ident
    o_ref[0] = jnp.where(out > 0, out, NEG_SLOPE * out).astype(o_ref.dtype)


def conv_block_forward(x_nchw, w1, w2, wid):
    """x_nchw: (N, Cin, H, W) f32; w1: (3,3,Cin,Cout) HWIO; w2: (3,3,Cout,Cout);
    wid: (Cin, Cout).  Returns (N, Cout, H, W) f32."""
    N, cin, H, W = x_nchw.shape
    cout = w1.shape[-1]
    HW = H * W

    # Layout glue: keep NCHW, just merge H,W onto the lane axis (free reshape;
    # no transpose / pad HBM round trips).
    x_flat = x_nchw.reshape(N, cin, HW)

    # im2col weight layout: rows ordered (dy, dx, ci) -> (Cout, 9*Cin),
    # cast to bf16 once (MXU-native); accumulation stays f32 in the kernel.
    w1_mat = w1.reshape(9 * cin, cout).T.astype(jnp.bfloat16)      # (Cout, 9*Cin)
    w2_mat = w2.reshape(9 * cout, cout).T.astype(jnp.bfloat16)     # (Cout, 9*Cout)
    wid_mat = wid.T.astype(jnp.bfloat16)                           # (Cout, Cin)

    kernel = functools.partial(_conv_block_kernel, H=H, W=W, cin=cin, cout=cout)
    pad_len = HW + 2 * (W + 1)

    out_flat = pl.pallas_call(
        kernel,
        out_shape=jax.ShapeDtypeStruct((N, cout, HW), jnp.float32),
        grid_spec=pltpu.PrefetchScalarGridSpec(
            num_scalar_prefetch=0,
            grid=(N,),
            in_specs=[
                pl.BlockSpec((1, cin, HW), lambda n: (n, 0, 0)),
                pl.BlockSpec((cout, 9 * cin), lambda n: (0, 0)),
                pl.BlockSpec((cout, 9 * cout), lambda n: (0, 0)),
                pl.BlockSpec((cout, cin), lambda n: (0, 0)),
            ],
            out_specs=pl.BlockSpec((1, cout, HW), lambda n: (n, 0, 0)),
            scratch_shapes=[
                pltpu.VMEM((cin, pad_len), jnp.float32),
                pltpu.VMEM((cout, pad_len), jnp.float32),
                pltpu.VMEM((9 * cin, HW), jnp.float32),
                pltpu.VMEM((9 * cout, HW), jnp.float32),
            ],
        ),
        compiler_params=pltpu.CompilerParams(
            dimension_semantics=("parallel",),
            vmem_limit_bytes=64 * 1024 * 1024,
        ),
    )(x_flat, w1_mat, w2_mat, wid_mat)

    return out_flat.reshape(N, cout, H, W)


def _reference(x_nchw, w1, w2, wid, matmul_dtype=jnp.float32):
    """Pure-JAX reference mirroring the PyTorch module (NCHW / OIHW).
    matmul_dtype lets us match the kernel's bf16 MXU operands exactly."""
    def conv(x, w_hwio, pad):
        w_oihw = jnp.transpose(w_hwio, (3, 2, 0, 1))
        return lax.conv_general_dilated(
            x.astype(matmul_dtype), w_oihw.astype(matmul_dtype),
            window_strides=(1, 1), padding=[(pad, pad), (pad, pad)],
            dimension_numbers=("NCHW", "OIHW", "NCHW"),
            preferred_element_type=jnp.float32)

    def inorm(x):
        mean = jnp.mean(x, axis=(2, 3), keepdims=True)
        var = jnp.mean((x - mean) ** 2, axis=(2, 3), keepdims=True)
        return (x - mean) * lax.rsqrt(var + EPS)

    def lrelu(v):
        return jnp.where(v > 0, v, NEG_SLOPE * v)

    y = lrelu(inorm(conv(x_nchw, w1, 1)))
    y = lrelu(inorm(conv(y, w2, 1)))
    ident = conv(x_nchw, wid[None, None, :, :], 0)
    return lrelu(y + ident)


if __name__ == "__main__":
    N, cin, cout, H, W = 2, 4, 8, 16, 16

    key = jax.random.PRNGKey(0)
    kx, k1, k2, k3 = jax.random.split(key, 4)
    x = jax.random.normal(kx, (N, cin, H, W), dtype=jnp.float32)
    # HWIO weight layouts, deterministic kaiming-ish fan-in scaling.
    w1 = jax.random.normal(k1, (3, 3, cin, cout), jnp.float32) * (1.0 / (3 * 3 * cin)) ** 0.5
    w2 = jax.random.normal(k2, (3, 3, cout, cout), jnp.float32) * (1.0 / (3 * 3 * cout)) ** 0.5
    wid = jax.random.normal(k3, (cin, cout), jnp.float32) * (1.0 / cin) ** 0.5

    out = jax.block_until_ready(conv_block_forward(x, w1, w2, wid))
    assert out.shape == (N, cout, H, W)

    # Matched-precision reference (conv operands rounded to bf16, f32 accumulation
    # and f32 norm/activations, like the kernel) -> tight check of the kernel math.
    ref_matched = jax.block_until_ready(_reference(x, w1, w2, wid, jnp.bfloat16))
    err_matched = float(jnp.max(jnp.abs(out - ref_matched)))
    assert err_matched < 2e-3, f"mismatch vs bf16-matched reference: {err_matched}"

    # Full-f32 reference (exact module semantics); the only difference is the
    # bf16 rounding of the MXU operands, amplified slightly by InstanceNorm.
    ref_f32 = jax.block_until_ready(_reference(x, w1, w2, wid, jnp.float32))
    err_f32 = float(jnp.max(jnp.abs(out - ref_f32)))
    assert err_f32 < 1e-1, f"mismatch vs f32 reference: {err_f32}"

    print("KERNEL_OK")
</pallas_src>

<mosaic_0001>
module attributes {stable_mosaic.version = 11 : i64} {
  func.func @_conv_block_kernel(%arg0: i32, %arg1: memref<1x4x256xf32, #tpu.memory_space<vmem>>, %arg2: memref<8x36xbf16, #tpu.memory_space<vmem>>, %arg3: memref<8x72xbf16, #tpu.memory_space<vmem>>, %arg4: memref<8x4xbf16, #tpu.memory_space<vmem>>, %arg5: memref<1x8x256xf32, #tpu.memory_space<vmem>>, %arg6: memref<4x290xf32, #tpu.memory_space<vmem>>, %arg7: memref<8x290xf32, #tpu.memory_space<vmem>>, %arg8: memref<36x256xf32, #tpu.memory_space<vmem>>, %arg9: memref<72x256xf32, #tpu.memory_space<vmem>>) attributes {dimension_semantics = [#tpu.dimension_semantics<parallel>], iteration_bounds = array<i64: 2>, scalar_prefetch = 0 : i64, scratch_operands = 4 : i64, tpu.core_type = #tpu.core_type<tc>, window_params = [{transform_indices = @transform_0, window_bounds = array<i64: 1, 4, 256>}, {pipeline_mode = #tpu.pipeline_mode<synchronous>, transform_indices = @transform_1, window_bounds = array<i64: 8, 36>}, {pipeline_mode = #tpu.pipeline_mode<synchronous>, transform_indices = @transform_2, window_bounds = array<i64: 8, 72>}, {pipeline_mode = #tpu.pipeline_mode<synchronous>, transform_indices = @transform_3, window_bounds = array<i64: 8, 4>}, {transform_indices = @transform_4, window_bounds = array<i64: 1, 8, 256>}]} {
    %0 = tpu.iota {dimensions = array<i32: 1>} : vector<1x256xi32>
    %c16_i32 = arith.constant 16 : i32
    %c0_i32 = arith.constant 0 : i32
    %1 = arith.cmpi eq, %c16_i32, %c0_i32 : i32
    %c1_i32 = arith.constant 1 : i32
    %2 = arith.select %1, %c1_i32, %c16_i32 : i32
    %3 = vector.broadcast %2 : i32 to vector<1x256xi32>
    %4 = arith.remsi %0, %3 : vector<1x256xi32>
    %c0_i32_0 = arith.constant 0 : i32
    %5 = vector.broadcast %c0_i32_0 : i32 to vector<1x256xi32>
    %6 = arith.cmpi ne, %4, %5 : vector<1x256xi32>
    %c0_i32_1 = arith.constant 0 : i32
    %7 = vector.broadcast %c0_i32_1 : i32 to vector<1x256xi32>
    %8 = arith.cmpi slt, %4, %7 : vector<1x256xi32>
    %c0_i32_2 = arith.constant 0 : i32
    %9 = arith.cmpi slt, %2, %c0_i32_2 : i32
    %10 = vector.broadcast %9 : i1 to vector<1x256xi1>
    %11 = vector.broadcast %10 : vector<1x256xi1> to vector<1x256xi1>
    %12 = arith.xori %8, %11 : vector<1x256xi1>
    %13 = arith.andi %12, %6 : vector<1x256xi1>
    %14 = vector.broadcast %2 : i32 to vector<1x256xi32>
    %15 = arith.addi %4, %14 : vector<1x256xi32>
    %16 = arith.select %13, %15, %4 : vector<1x256xi1>, vector<1x256xi32>
    %c0_i32_3 = arith.constant 0 : i32
    %17 = vector.broadcast %c0_i32_3 : i32 to vector<1x256xi32>
    %18 = arith.cmpi ne, %16, %17 : vector<1x256xi32>
    %c15_i32 = arith.constant 15 : i32
    %19 = vector.broadcast %c15_i32 : i32 to vector<1x256xi32>
    %20 = arith.cmpi ne, %16, %19 : vector<1x256xi32>
    %c0 = arith.constant 0 : index
    %c0_4 = arith.constant 0 : index
    %c0_5 = arith.constant 0 : index
    %21 = vector.load %arg1[%c0, %c0_4, %c0_5] : memref<1x4x256xf32, #tpu.memory_space<vmem>>, vector<1x4x256xf32>
    %22 = vector.shape_cast %21 : vector<1x4x256xf32> to vector<4x256xf32>
    %cst = arith.constant 0.000000e+00 : f32
    %23 = vector.broadcast %cst : f32 to vector<4x17xf32>
    %c0_6 = arith.constant 0 : index
    %c0_7 = arith.constant 0 : index
    %24 = vector.load %arg6[%c0_6, %c0_7] : memref<4x290xf32, #tpu.memory_space<vmem>>, vector<4x17xf32>
    tpu.vector_store %arg6[%c0_6, %c0_7], %23 {strides = array<i32>} : memref<4x290xf32, #tpu.memory_space<vmem>>, vector<4x17xf32>,
    %cst_8 = arith.constant 0.000000e+00 : f32
    %25 = vector.broadcast %cst_8 : f32 to vector<4x17xf32>
    %c0_9 = arith.constant 0 : index
    %c273 = arith.constant 273 : index
    %26 = vector.load %arg6[%c0_9, %c273] : memref<4x290xf32, #tpu.memory_space<vmem>>, vector<4x17xf32>
    tpu.vector_store %arg6[%c0_9, %c273], %25 {strides = array<i32>} : memref<4x290xf32, #tpu.memory_space<vmem>>, vector<4x17xf32>,
    %c0_10 = arith.constant 0 : index
    %c17 = arith.constant 17 : index
    %27 = vector.load %arg6[%c0_10, %c17] : memref<4x290xf32, #tpu.memory_space<vmem>>, vector<4x256xf32>
    tpu.vector_store %arg6[%c0_10, %c17], %22 {strides = array<i32>} : memref<4x290xf32, #tpu.memory_space<vmem>>, vector<4x256xf32>,
    %c0_11 = arith.constant 0 : index
    %c0_12 = arith.constant 0 : index
    %28 = vector.load %arg6[%c0_11, %c0_12] : memref<4x290xf32, #tpu.memory_space<vmem>>, vector<4x256xf32>
    %cst_13 = arith.constant 0.000000e+00 : f32
    %29 = vector.shape_cast %18 : vector<1x256xi1> to vector<1x256xi1>
    %30 = vector.broadcast %29 : vector<1x256xi1> to vector<4x256xi1>
    %31 = vector.broadcast %cst_13 : f32 to vector<4x256xf32>
    %32 = arith.select %30, %28, %31 : vector<4x256xi1>, vector<4x256xf32>
    %c0_14 = arith.constant 0 : index
    %c0_15 = arith.constant 0 : index
    %33 = vector.load %arg8[%c0_14, %c0_15] : memref<36x256xf32, #tpu.memory_space<vmem>>, vector<4x256xf32>
    tpu.vector_store %arg8[%c0_14, %c0_15], %32 {strides = array<i32>} : memref<36x256xf32, #tpu.memory_space<vmem>>, vector<4x256xf32>,
    %c0_16 = arith.constant 0 : index
    %c1 = arith.constant 1 : index
    %34 = vector.load %arg6[%c0_16, %c1] : memref<4x290xf32, #tpu.memory_space<vmem>>, vector<4x256xf32>
    %c4 = arith.constant 4 : index
    %c0_17 = arith.constant 0 : index
    %35 = vector.load %arg8[%c4, %c0_17] : memref<36x256xf32, #tpu.memory_space<vmem>>, vector<4x256xf32>
    tpu.vector_store %arg8[%c4, %c0_17], %34 {strides = array<i32>} : memref<36x256xf32, #tpu.memory_space<vmem>>, vector<4x256xf32>,
    %c0_18 = arith.constant 0 : index
    %c2 = arith.constant 2 : index
    %36 = vector.load %arg6[%c0_18, %c2] : memref<4x290xf32, #tpu.memory_space<vmem>>, vector<4x256xf32>
    %cst_19 = arith.constant 0.000000e+00 : f32
    %37 = vector.shape_cast %20 : vector<1x256xi1> to vector<1x256xi1>
    %38 = vector.broadcast %37 : vector<1x256xi1> to vector<4x256xi1>
    %39 = vector.broadcast %cst_19 : f32 to vector<4x256xf32>
    %40 = arith.select %38, %36, %39 : vector<4x256xi1>, vector<4x256xf32>
    %c8 = arith.constant 8 : index
    %c0_20 = arith.constant 0 : index
    %41 = vector.load %arg8[%c8, %c0_20] : memref<36x256xf32, #tpu.memory_space<vmem>>, vector<4x256xf32>
    tpu.vector_store %arg8[%c8, %c0_20], %40 {strides = array<i32>} : memref<36x256xf32, #tpu.memory_space<vmem>>, vector<4x256xf32>,
    %c0_21 = arith.constant 0 : index
    %c16 = arith.constant 16 : index
    %42 = vector.load %arg6[%c0_21, %c16] : memref<4x290xf32, #tpu.memory_space<vmem>>, vector<4x256xf32>
    %cst_22 = arith.constant 0.000000e+00 : f32
    %43 = vector.shape_cast %18 : vector<1x256xi1> to vector<1x256xi1>
    %44 = vector.broadcast %43 : vector<1x256xi1> to vector<4x256xi1>
    %45 = vector.broadcast %cst_22 : f32 to vector<4x256xf32>
    %46 = arith.select %44, %42, %45 : vector<4x256xi1>, vector<4x256xf32>
    %c12 = arith.constant 12 : index
    %c0_23 = arith.constant 0 : index
    %47 = vector.load %arg8[%c12, %c0_23] : memref<36x256xf32, #tpu.memory_space<vmem>>, vector<4x256xf32>
    tpu.vector_store %arg8[%c12, %c0_23], %46 {strides = array<i32>} : memref<36x256xf32, #tpu.memory_space<vmem>>, vector<4x256xf32>,
    %c0_24 = arith.constant 0 : index
    %c17_25 = arith.constant 17 : index
    %48 = vector.load %arg6[%c0_24, %c17_25] : memref<4x290xf32, #tpu.memory_space<vmem>>, vector<4x256xf32>
    %c16_26 = arith.constant 16 : index
    %c0_27 = arith.constant 0 : index
    %49 = vector.load %arg8[%c16_26, %c0_27] : memref<36x256xf32, #tpu.memory_space<vmem>>, vector<4x256xf32>
    tpu.vector_store %arg8[%c16_26, %c0_27], %48 {strides = array<i32>} : memref<36x256xf32, #tpu.memory_space<vmem>>, vector<4x256xf32>,
    %c0_28 = arith.constant 0 : index
    %c18 = arith.constant 18 : index
    %50 = vector.load %arg6[%c0_28, %c18] : memref<4x290xf32, #tpu.memory_space<vmem>>, vector<4x256xf32>
    %cst_29 = arith.constant 0.000000e+00 : f32
    %51 = vector.shape_cast %20 : vector<1x256xi1> to vector<1x256xi1>
    %52 = vector.broadcast %51 : vector<1x256xi1> to vector<4x256xi1>
    %53 = vector.broadcast %cst_29 : f32 to vector<4x256xf32>
    %54 = arith.select %52, %50, %53 : vector<4x256xi1>, vector<4x256xf32>
    %c20 = arith.constant 20 : index
    %c0_30 = arith.constant 0 : index
    %55 = vector.load %arg8[%c20, %c0_30] : memref<36x256xf32, #tpu.memory_space<vmem>>, vector<4x256xf32>
    tpu.vector_store %arg8[%c20, %c0_30], %54 {strides = array<i32>} : memref<36x256xf32, #tpu.memory_space<vmem>>, vector<4x256xf32>,
    %c0_31 = arith.constant 0 : index
    %c32 = arith.constant 32 : index
    %56 = vector.load %arg6[%c0_31, %c32] : memref<4x290xf32, #tpu.memory_space<vmem>>, vector<4x256xf32>
    %cst_32 = arith.constant 0.000000e+00 : f32
    %57 = vector.shape_cast %18 : vector<1x256xi1> to vector<1x256xi1>
    %58 = vector.broadcast %57 : vector<1x256xi1> to vector<4x256xi1>
    %59 = vector.broadcast %cst_32 : f32 to vector<4x256xf32>
    %60 = arith.select %58, %56, %59 : vector<4x256xi1>, vector<4x256xf32>
    %c24 = arith.constant 24 : index
    %c0_33 = arith.constant 0 : index
    %61 = vector.load %arg8[%c24, %c0_33] : memref<36x256xf32, #tpu.memory_space<vmem>>, vector<4x256xf32>
    tpu.vector_store %arg8[%c24, %c0_33], %60 {strides = array<i32>} : memref<36x256xf32, #tpu.memory_space<vmem>>, vector<4x256xf32>,
    %c0_34 = arith.constant 0 : index
    %c33 = arith.constant 33 : index
    %62 = vector.load %arg6[%c0_34, %c33] : memref<4x290xf32, #tpu.memory_space<vmem>>, vector<4x256xf32>
    %c28 = arith.constant 28 : index
    %c0_35 = arith.constant 0 : index
    %63 = vector.load %arg8[%c28, %c0_35] : memref<36x256xf32, #tpu.memory_space<vmem>>, vector<4x256xf32>
    tpu.vector_store %arg8[%c28, %c0_35], %62 {strides = array<i32>} : memref<36x256xf32, #tpu.memory_space<vmem>>, vector<4x256xf32>,
    %c0_36 = arith.constant 0 : index
    %c34 = arith.constant 34 : index
    %64 = vector.load %arg6[%c0_36, %c34] : memref<4x290xf32, #tpu.memory_space<vmem>>, vector<4x256xf32>
    %cst_37 = arith.constant 0.000000e+00 : f32
    %65 = vector.shape_cast %20 : vector<1x256xi1> to vector<1x256xi1>
    %66 = vector.broadcast %65 : vector<1x256xi1> to vector<4x256xi1>
    %67 = vector.broadcast %cst_37 : f32 to vector<4x256xf32>
    %68 = arith.select %66, %64, %67 : vector<4x256xi1>, vector<4x256xf32>
    %c32_38 = arith.constant 32 : index
    %c0_39 = arith.constant 0 : index
    %69 = vector.load %arg8[%c32_38, %c0_39] : memref<36x256xf32, #tpu.memory_space<vmem>>, vector<4x256xf32>
    tpu.vector_store %arg8[%c32_38, %c0_39], %68 {strides = array<i32>} : memref<36x256xf32, #tpu.memory_space<vmem>>, vector<4x256xf32>,
    %c0_40 = arith.constant 0 : index
    %c0_41 = arith.constant 0 : index
    %70 = vector.load %arg2[%c0_40, %c0_41] : memref<8x36xbf16, #tpu.memory_space<vmem>>, vector<8x36xbf16>
    %c0_42 = arith.constant 0 : index
    %c0_43 = arith.constant 0 : index
    %71 = vector.load %arg8[%c0_42, %c0_43] : memref<36x256xf32, #tpu.memory_space<vmem>>, vector<36x256xf32>
    %72 = arith.truncf %71 : vector<36x256xf32> to vector<36x256xbf16>
    %cst_44 = arith.constant dense<0.000000e+00> : vector<8x256xf32>
    %73 = tpu.matmul %70, %72, %cst_44 {dimension_numbers = #tpu.dot_dimension_numbers<[1], [0], [0], [1], [0, 0, 1, 1], [], []>} : vector<8x36xbf16>, vector<36x256xbf16>, vector<8x256xf32> -> vector<8x256xf32>
    %cst_45 = arith.constant dense<0.000000e+00> : vector<8xf32>
    %74 = vector.multi_reduction <add>, %73, %cst_45 [1] : vector<8x256xf32> to vector<8xf32>
    %75 = vector.shape_cast %74 : vector<8xf32> to vector<8x1xf32>
    %cst_46 = arith.constant 3.906250e-03 : f32
    %76 = vector.broadcast %cst_46 : f32 to vector<8x1xf32>
    %77 = arith.mulf %75, %76 : vector<8x1xf32>
    %78 = arith.mulf %73, %73 : vector<8x256xf32>
    %cst_47 = arith.constant dense<0.000000e+00> : vector<8xf32>
    %79 = vector.multi_reduction <add>, %78, %cst_47 [1] : vector<8x256xf32> to vector<8xf32>
    %80 = vector.shape_cast %79 : vector<8xf32> to vector<8x1xf32>
    %cst_48 = arith.constant 3.906250e-03 : f32
    %81 = vector.broadcast %cst_48 : f32 to vector<8x1xf32>
    %82 = arith.mulf %80, %81 : vector<8x1xf32>
    %83 = arith.mulf %77, %77 : vector<8x1xf32>
    %84 = arith.subf %82, %83 : vector<8x1xf32>
    %cst_49 = arith.constant 0.000000e+00 : f32
    %85 = vector.broadcast %cst_49 : f32 to vector<8x1xf32>
    %86 = arith.maximumf %84, %85 : vector<8x1xf32>
    %87 = vector.broadcast %77 : vector<8x1xf32> to vector<8x256xf32>
    %88 = arith.subf %73, %87 : vector<8x256xf32>
    %cst_50 = arith.constant 9.99999974E-6 : f32
    %89 = vector.broadcast %cst_50 : f32 to vector<8x1xf32>
    %90 = arith.addf %86, %89 : vector<8x1xf32>
    %91 = math.rsqrt %90 : vector<8x1xf32>
    %92 = vector.broadcast %91 : vector<8x1xf32> to vector<8x256xf32>
    %93 = arith.mulf %88, %92 : vector<8x256xf32>
    %cst_51 = arith.constant 0.000000e+00 : f32
    %94 = vector.broadcast %cst_51 : f32 to vector<8x256xf32>
    %95 = arith.cmpf ogt, %93, %94 : vector<8x256xf32>
    %cst_52 = arith.constant 2.000000e-01 : f32
    %96 = vector.broadcast %cst_52 : f32 to vector<8x256xf32>
    %97 = arith.mulf %96, %93 : vector<8x256xf32>
    %98 = arith.select %95, %93, %97 : vector<8x256xi1>, vector<8x256xf32>
    %cst_53 = arith.constant 0.000000e+00 : f32
    %99 = vector.broadcast %cst_53 : f32 to vector<8x17xf32>
    %c0_54 = arith.constant 0 : index
    %c0_55 = arith.constant 0 : index
    %100 = vector.load %arg7[%c0_54, %c0_55] : memref<8x290xf32, #tpu.memory_space<vmem>>, vector<8x17xf32>
    tpu.vector_store %arg7[%c0_54, %c0_55], %99 {strides = array<i32>} : memref<8x290xf32, #tpu.memory_space<vmem>>, vector<8x17xf32>,
    %cst_56 = arith.constant 0.000000e+00 : f32
    %101 = vector.broadcast %cst_56 : f32 to vector<8x17xf32>
    %c0_57 = arith.constant 0 : index
    %c273_58 = arith.constant 273 : index
    %102 = vector.load %arg7[%c0_57, %c273_58] : memref<8x290xf32, #tpu.memory_space<vmem>>, vector<8x17xf32>
    tpu.vector_store %arg7[%c0_57, %c273_58], %101 {strides = array<i32>} : memref<8x290xf32, #tpu.memory_space<vmem>>, vector<8x17xf32>,
    %c0_59 = arith.constant 0 : index
    %c17_60 = arith.constant 17 : index
    %103 = vector.load %arg7[%c0_59, %c17_60] : memref<8x290xf32, #tpu.memory_space<vmem>>, vector<8x256xf32>
    tpu.vector_store %arg7[%c0_59, %c17_60], %98 {strides = array<i32>} : memref<8x290xf32, #tpu.memory_space<vmem>>, vector<8x256xf32>,
    %c0_61 = arith.constant 0 : index
    %c0_62 = arith.constant 0 : index
    %104 = vector.load %arg7[%c0_61, %c0_62] : memref<8x290xf32, #tpu.memory_space<vmem>>, vector<8x256xf32>
    %cst_63 = arith.constant 0.000000e+00 : f32
    %105 = vector.shape_cast %18 : vector<1x256xi1> to vector<1x256xi1>
    %106 = vector.broadcast %105 : vector<1x256xi1> to vector<8x256xi1>
    %107 = vector.broadcast %cst_63 : f32 to vector<8x256xf32>
    %108 = arith.select %106, %104, %107 : vector<8x256xi1>, vector<8x256xf32>
    %c0_64 = arith.constant 0 : index
    %c0_65 = arith.constant 0 : index
    %109 = vector.load %arg9[%c0_64, %c0_65] : memref<72x256xf32, #tpu.memory_space<vmem>>, vector<8x256xf32>
    tpu.vector_store %arg9[%c0_64, %c0_65], %108 {strides = array<i32>} : memref<72x256xf32, #tpu.memory_space<vmem>>, vector<8x256xf32>,
    %c0_66 = arith.constant 0 : index
    %c1_67 = arith.constant 1 : index
    %110 = vector.load %arg7[%c0_66, %c1_67] : memref<8x290xf32, #tpu.memory_space<vmem>>, vector<8x256xf32>
    %c8_68 = arith.constant 8 : index
    %c0_69 = arith.constant 0 : index
    %111 = vector.load %arg9[%c8_68, %c0_69] : memref<72x256xf32, #tpu.memory_space<vmem>>, vector<8x256xf32>
    tpu.vector_store %arg9[%c8_68, %c0_69], %110 {strides = array<i32>} : memref<72x256xf32, #tpu.memory_space<vmem>>, vector<8x256xf32>,
    %c0_70 = arith.constant 0 : index
    %c2_71 = arith.constant 2 : index
    %112 = vector.load %arg7[%c0_70, %c2_71] : memref<8x290xf32, #tpu.memory_space<vmem>>, vector<8x256xf32>
    %cst_72 = arith.constant 0.000000e+00 : f32
    %113 = vector.shape_cast %20 : vector<1x256xi1> to vector<1x256xi1>
    %114 = vector.broadcast %113 : vector<1x256xi1> to vector<8x256xi1>
    %115 = vector.broadcast %cst_72 : f32 to vector<8x256xf32>
    %116 = arith.select %114, %112, %115 : vector<8x256xi1>, vector<8x256xf32>
    %c16_73 = arith.constant 16 : index
    %c0_74 = arith.constant 0 : index
    %117 = vector.load %arg9[%c16_73, %c0_74] : memref<72x256xf32, #tpu.memory_space<vmem>>, vector<8x256xf32>
    tpu.vector_store %arg9[%c16_73, %c0_74], %116 {strides = array<i32>} : memref<72x256xf32, #tpu.memory_space<vmem>>, vector<8x256xf32>,
    %c0_75 = arith.constant 0 : index
    %c16_76 = arith.constant 16 : index
    %118 = vector.load %arg7[%c0_75, %c16_76] : memref<8x290xf32, #tpu.memory_space<vmem>>, vector<8x256xf32>
    %cst_77 = arith.constant 0.000000e+00 : f32
    %119 = vector.shape_cast %18 : vector<1x256xi1> to vector<1x256xi1>
    %120 = vector.broadcast %119 : vector<1x256xi1> to vector<8x256xi1>
    %121 = vector.broadcast %cst_77 : f32 to vector<8x256xf32>
    %122 = arith.select %120, %118, %121 : vector<8x256xi1>, vector<8x256xf32>
    %c24_78 = arith.constant 24 : index
    %c0_79 = arith.constant 0 : index
    %123 = vector.load %arg9[%c24_78, %c0_79] : memref<72x256xf32, #tpu.memory_space<vmem>>, vector<8x256xf32>
    tpu.vector_store %arg9[%c24_78, %c0_79], %122 {strides = array<i32>} : memref<72x256xf32, #tpu.memory_space<vmem>>, vector<8x256xf32>,
    %c0_80 = arith.constant 0 : index
    %c17_81 = arith.constant 17 : index
    %124 = vector.load %arg7[%c0_80, %c17_81] : memref<8x290xf32, #tpu.memory_space<vmem>>, vector<8x256xf32>
    %c32_82 = arith.constant 32 : index
    %c0_83 = arith.constant 0 : index
    %125 = vector.load %arg9[%c32_82, %c0_83] : memref<72x256xf32, #tpu.memory_space<vmem>>, vector<8x256xf32>
    tpu.vector_store %arg9[%c32_82, %c0_83], %124 {strides = array<i32>} : memref<72x256xf32, #tpu.memory_space<vmem>>, vector<8x256xf32>,
    %c0_84 = arith.constant 0 : index
    %c18_85 = arith.constant 18 : index
    %126 = vector.load %arg7[%c0_84, %c18_85] : memref<8x290xf32, #tpu.memory_space<vmem>>, vector<8x256xf32>
    %cst_86 = arith.constant 0.000000e+00 : f32
    %127 = vector.shape_cast %20 : vector<1x256xi1> to vector<1x256xi1>
    %128 = vector.broadcast %127 : vector<1x256xi1> to vector<8x256xi1>
    %129 = vector.broadcast %cst_86 : f32 to vector<8x256xf32>
    %130 = arith.select %128, %126, %129 : vector<8x256xi1>, vector<8x256xf32>
    %c40 = arith.constant 40 : index
    %c0_87 = arith.constant 0 : index
    %131 = vector.load %arg9[%c40, %c0_87] : memref<72x256xf32, #tpu.memory_space<vmem>>, vector<8x256xf32>
    tpu.vector_store %arg9[%c40, %c0_87], %130 {strides = array<i32>} : memref<72x256xf32, #tpu.memory_space<vmem>>, vector<8x256xf32>,
    %c0_88 = arith.constant 0 : index
    %c32_89 = arith.constant 32 : index
    %132 = vector.load %arg7[%c0_88, %c32_89] : memref<8x290xf32, #tpu.memory_space<vmem>>, vector<8x256xf32>
    %cst_90 = arith.constant 0.000000e+00 : f32
    %133 = vector.shape_cast %18 : vector<1x256xi1> to vector<1x256xi1>
    %134 = vector.broadcast %133 : vector<1x256xi1> to vector<8x256xi1>
    %135 = vector.broadcast %cst_90 : f32 to vector<8x256xf32>
    %136 = arith.select %134, %132, %135 : vector<8x256xi1>, vector<8x256xf32>
    %c48 = arith.constant 48 : index
    %c0_91 = arith.constant 0 : index
    %137 = vector.load %arg9[%c48, %c0_91] : memref<72x256xf32, #tpu.memory_space<vmem>>, vector<8x256xf32>
    tpu.vector_store %arg9[%c48, %c0_91], %136 {strides = array<i32>} : memref<72x256xf32, #tpu.memory_space<vmem>>, vector<8x256xf32>,
    %c0_92 = arith.constant 0 : index
    %c33_93 = arith.constant 33 : index
    %138 = vector.load %arg7[%c0_92, %c33_93] : memref<8x290xf32, #tpu.memory_space<vmem>>, vector<8x256xf32>
    %c56 = arith.constant 56 : index
    %c0_94 = arith.constant 0 : index
    %139 = vector.load %arg9[%c56, %c0_94] : memref<72x256xf32, #tpu.memory_space<vmem>>, vector<8x256xf32>
    tpu.vector_store %arg9[%c56, %c0_94], %138 {strides = array<i32>} : memref<72x256xf32, #tpu.memory_space<vmem>>, vector<8x256xf32>,
    %c0_95 = arith.constant 0 : index
    %c34_96 = arith.constant 34 : index
    %140 = vector.load %arg7[%c0_95, %c34_96] : memref<8x290xf32, #tpu.memory_space<vmem>>, vector<8x256xf32>
    %cst_97 = arith.constant 0.000000e+00 : f32
    %141 = vector.shape_cast %20 : vector<1x256xi1> to vector<1x256xi1>
    %142 = vector.broadcast %141 : vector<1x256xi1> to vector<8x256xi1>
    %143 = vector.broadcast %cst_97 : f32 to vector<8x256xf32>
    %144 = arith.select %142, %140, %143 : vector<8x256xi1>, vector<8x256xf32>
    %c64 = arith.constant 64 : index
    %c0_98 = arith.constant 0 : index
    %145 = vector.load %arg9[%c64, %c0_98] : memref<72x256xf32, #tpu.memory_space<vmem>>, vector<8x256xf32>
    tpu.vector_store %arg9[%c64, %c0_98], %144 {strides = array<i32>} : memref<72x256xf32, #tpu.memory_space<vmem>>, vector<8x256xf32>,
    %c0_99 = arith.constant 0 : index
    %c0_100 = arith.constant 0 : index
    %146 = vector.load %arg3[%c0_99, %c0_100] : memref<8x72xbf16, #tpu.memory_space<vmem>>, vector<8x72xbf16>
    %c0_101 = arith.constant 0 : index
    %c0_102 = arith.constant 0 : index
    %147 = vector.load %arg9[%c0_101, %c0_102] : memref<72x256xf32, #tpu.memory_space<vmem>>, vector<72x256xf32>
    %148 = arith.truncf %147 : vector<72x256xf32> to vector<72x256xbf16>
    %cst_103 = arith.constant dense<0.000000e+00> : vector<8x256xf32>
    %149 = tpu.matmul %146, %148, %cst_103 {dimension_numbers = #tpu.dot_dimension_numbers<[1], [0], [0], [1], [0, 0, 1, 1], [], []>} : vector<8x72xbf16>, vector<72x256xbf16>, vector<8x256xf32> -> vector<8x256xf32>
    %cst_104 = arith.constant dense<0.000000e+00> : vector<8xf32>
    %150 = vector.multi_reduction <add>, %149, %cst_104 [1] : vector<8x256xf32> to vector<8xf32>
    %151 = vector.shape_cast %150 : vector<8xf32> to vector<8x1xf32>
    %cst_105 = arith.constant 3.906250e-03 : f32
    %152 = vector.broadcast %cst_105 : f32 to vector<8x1xf32>
    %153 = arith.mulf %151, %152 : vector<8x1xf32>
    %154 = arith.mulf %149, %149 : vector<8x256xf32>
    %cst_106 = arith.constant dense<0.000000e+00> : vector<8xf32>
    %155 = vector.multi_reduction <add>, %154, %cst_106 [1] : vector<8x256xf32> to vector<8xf32>
    %156 = vector.shape_cast %155 : vector<8xf32> to vector<8x1xf32>
    %cst_107 = arith.constant 3.906250e-03 : f32
    %157 = vector.broadcast %cst_107 : f32 to vector<8x1xf32>
    %158 = arith.mulf %156, %157 : vector<8x1xf32>
    %159 = arith.mulf %153, %153 : vector<8x1xf32>
    %160 = arith.subf %158, %159 : vector<8x1xf32>
    %cst_108 = arith.constant 0.000000e+00 : f32
    %161 = vector.broadcast %cst_108 : f32 to vector<8x1xf32>
    %162 = arith.maximumf %160, %161 : vector<8x1xf32>
    %163 = vector.broadcast %153 : vector<8x1xf32> to vector<8x256xf32>
    %164 = arith.subf %149, %163 : vector<8x256xf32>
    %cst_109 = arith.constant 9.99999974E-6 : f32
    %165 = vector.broadcast %cst_109 : f32 to vector<8x1xf32>
    %166 = arith.addf %162, %165 : vector<8x1xf32>
    %167 = math.rsqrt %166 : vector<8x1xf32>
    %168 = vector.broadcast %167 : vector<8x1xf32> to vector<8x256xf32>
    %169 = arith.mulf %164, %168 : vector<8x256xf32>
    %cst_110 = arith.constant 0.000000e+00 : f32
    %170 = vector.broadcast %cst_110 : f32 to vector<8x256xf32>
    %171 = arith.cmpf ogt, %169, %170 : vector<8x256xf32>
    %cst_111 = arith.constant 2.000000e-01 : f32
    %172 = vector.broadcast %cst_111 : f32 to vector<8x256xf32>
    %173 = arith.mulf %172, %169 : vector<8x256xf32>
    %174 = arith.select %171, %169, %173 : vector<8x256xi1>, vector<8x256xf32>
    %c0_112 = arith.constant 0 : index
    %c0_113 = arith.constant 0 : index
    %175 = vector.load %arg4[%c0_112, %c0_113] : memref<8x4xbf16, #tpu.memory_space<vmem>>, vector<8x4xbf16>
    %176 = arith.truncf %22 : vector<4x256xf32> to vector<4x256xbf16>
    %cst_114 = arith.constant dense<0.000000e+00> : vector<8x256xf32>
    %177 = tpu.matmul %175, %176, %cst_114 {dimension_numbers = #tpu.dot_dimension_numbers<[1], [0], [0], [1], [0, 0, 1, 1], [], []>} : vector<8x4xbf16>, vector<4x256xbf16>, vector<8x256xf32> -> vector<8x256xf32>
    %178 = arith.addf %174, %177 : vector<8x256xf32>
    %cst_115 = arith.constant 0.000000e+00 : f32
    %179 = vector.broadcast %cst_115 : f32 to vector<8x256xf32>
    %180 = arith.cmpf ogt, %178, %179 : vector<8x256xf32>
    %cst_116 = arith.constant 2.000000e-01 : f32
    %181 = vector.broadcast %cst_116 : f32 to vector<8x256xf32>
    %182 = arith.mulf %181, %178 : vector<8x256xf32>
    %183 = arith.select %180, %178, %182 : vector<8x256xi1>, vector<8x256xf32>
    %c0_117 = arith.constant 0 : index
    %c0_118 = arith.constant 0 : index
    %c0_119 = arith.constant 0 : index
    %184 = vector.load %arg5[%c0_117, %c0_118, %c0_119] : memref<1x8x256xf32, #tpu.memory_space<vmem>>, vector<1x8x256xf32>
    %185 = vector.shape_cast %184 : vector<1x8x256xf32> to vector<8x256xf32>
    %186 = vector.shape_cast %183 : vector<8x256xf32> to vector<1x8x256xf32>
    tpu.vector_store %arg5[%c0_117, %c0_118, %c0_119], %186 {strides = array<i32>} : memref<1x8x256xf32, #tpu.memory_space<vmem>>, vector<1x8x256xf32>,
    return
  }
  func.func @transform_0(%arg0: i32) -> (i32, i32, i32) {
    %c0_i32 = arith.constant 0 : i32
    %c0_i32_0 = arith.constant 0 : i32
    %c0_i32_1 = arith.constant 0 : i32
    return %arg0, %c0_i32, %c0_i32_0 : i32, i32, i32
  }
  func.func @transform_1(%arg0: i32) -> (i32, i32) {
    %c0_i32 = arith.constant 0 : i32
    %c0_i32_0 = arith.constant 0 : i32
    %c0_i32_1 = arith.constant 0 : i32
    return %c0_i32, %c0_i32_0 : i32, i32
  }
  func.func @transform_2(%arg0: i32) -> (i32, i32) {
    %c0_i32 = arith.constant 0 : i32
    %c0_i32_0 = arith.constant 0 : i32
    %c0_i32_1 = arith.constant 0 : i32
    return %c0_i32, %c0_i32_0 : i32, i32
  }
  func.func @transform_3(%arg0: i32) -> (i32, i32) {
    %c0_i32 = arith.constant 0 : i32
    %c0_i32_0 = arith.constant 0 : i32
    %c0_i32_1 = arith.constant 0 : i32
    return %c0_i32, %c0_i32_0 : i32, i32
  }
  func.func @transform_4(%arg0: i32) -> (i32, i32, i32) {
    %c0_i32 = arith.constant 0 : i32
    %c0_i32_0 = arith.constant 0 : i32
    %c0_i32_1 = arith.constant 0 : i32
    return %arg0, %c0_i32, %c0_i32_0 : i32, i32, i32
  }
}

</mosaic_0001>

<llo_original>
// kernel: tpu_custom_call.1
$region0: #{tpu_custom_call.1}
  #allocation0 [shape = 'u32[]', space=smem, size = 0x4, offset = 0x4, fixed_abs, tag = 'smem constant byte address 0x4 - core index']
  #allocation1 [shape = 'u32[72,128]{1,0:T(1,128)}', space=vmem, size = 0x9000, scoped, tag = 'internal scratch']
  #allocation2 [shape = 'f32[4,290]{1,0:T(4,128)}', space=vmem, size = 0x1800, scoped, tag = 'scratch operand']
  #allocation3 [shape = 'f32[8,290]{1,0:T(8,128)}', space=vmem, size = 0x3000, scoped, tag = 'scratch operand']
  #allocation4 [shape = 'f32[36,256]{1,0:T(8,128)}', space=vmem, size = 0xa000, scoped, tag = 'scratch operand']
  #allocation5 [shape = 'f32[72,256]{1,0:T(8,128)}', space=vmem, size = 0x12000, scoped, tag = 'scratch operand']
  %s0 = inlined_call_operand.hbm [shape: f32[2,4,256], index: 0, kind: input, shape index: {}]
  %s1 = inlined_call_operand.vmem [shape: bf16[8,36], index: 1, kind: input, shape index: {}]
  %s2 = inlined_call_operand.hbm [shape: bf16[8,72], index: 2, kind: input, shape index: {}]
  %s3 = inlined_call_operand.vmem [shape: bf16[8,4], index: 3, kind: input, shape index: {}]
  %s4 = inlined_call_operand.hbm [shape: f32[2,8,256], index: 4, kind: output, shape index: {}]
  %s5 = sld [smem:[#allocation0]]
  $region57: #{tpu_custom_call.1} parent=0
    _
  %s7 = ssub.s32 1, %s5
  %s8 = scalar_select 0, %s7, %s5
  $region1: #{tpu_custom_call.1} parent=0
    #allocation6 [shape = 'u8[8192]{0}', space=vmem, size = 0x2000, scoped, tag = 'input window, operand 0']
    #allocation7 [shape = 's32[2]{0}', space=sflag, size = 0x8, scoped, tag = 'scoped memory for tpu_custom_call.1']
    #allocation8 [shape = 's32[2]{0}', space=sflag, size = 0x8, scoped, tag = 'scoped memory for tpu_custom_call.1']
    #allocation9 [shape = 'u8[2048]{0}', space=vmem, size = 0x800, scoped, tag = 'input window, operand 2, single buffered']
    #allocation10 [shape = 's32[1]{0}', space=sflag, size = 0x4, scoped, tag = 'scoped memory for tpu_custom_call.1']
    #allocation11 [shape = 'u8[16384]{0}', space=vmem, size = 0x4000, scoped, tag = 'output window, operand 0']
    %9 = vsyncpa [#allocation7], 0
    %s10 = scalar_lea.sflag [#allocation7], 1
    %11 = vsyncpa %s10, 0
    %12 = vsyncpa [#allocation10], 0
    %13 = vsyncpa [#allocation8], 0
    %s14 = scalar_lea.sflag [#allocation8], 1
    %15 = vsyncpa %s14, 0
    loop: start=0, step=1, limit=4
    $region2: #{tpu_custom_call.1} parent=1 // loop_pre_header
      _
    $region3: #{tpu_custom_call.1} parent=1 // loop_header
      %s17 = sphi 0, %s21
      %p18 = scmp.ge.s32.totalorder %s17, 4
      %s27 = sphi 0, %s29
      %s30 = sphi 0, %s27
      %s31 = sphi 0, %s30
      %s47 = sphi 0, %s31
      %s51 = sphi 0, %s51
      %s53 = sphi 0, %s51
      %s54 = sphi 0, %s53
      %s68 = sphi 0, %s54
      %s72 = sphi 0, %s72
      %s74 = sphi 0, %s72
      %s75 = sphi 0, %s74
      %s89 = sphi 0, %s75
      %s93 = sphi 0, %s93
      %s95 = sphi 0, %s93
      %s96 = sphi 0, %s95
      %s110 = sphi 0, %s96
      %s116 = sphi 0, %s118
      %s119 = sphi 0, %s116
      %s120 = sphi 0, %s119
      %s136 = sphi 0, %s120
    $region4: #{tpu_custom_call.1} parent=1 // loop_header_branch
      %20 = sbr.rel (%p18) target = $region8
    $region5: #{tpu_custom_call.1} parent=1 // loop_body
      %s22 = ssub.s32 %s17, 1
      %s23 = ssub.s32 %s17, 2
      %s24 = sadd.s32 %s17, 1
      %s25 = ssub.s32 %s17, %s24
      %p26 = scmp.eq.s32.totalorder %s25, 0
      %s28 = sadd.s32 %s27, 1
      %s29 = scalar_select %p26, %s27, %s28
      %p32 = pneg %p26
      %p33 = scmp.eq.s32.totalorder %s17, 1
      %p34 = por %p32, %p33
      %p35 = scmp.ne.s32.totalorder %s27, %s30
      %p36 = scmp.eq.s32.totalorder %s17, 0
      %p37 = por %p35, %p36
      %p38 = scmp.ne.s32.totalorder %s27, %s30
      %p39 = scmp.eq.s32.totalorder %s22, 1
      %p40 = por %p38, %p39
      %p41 = scmp.ne.s32.totalorder %s30, %s31
      %p42 = scmp.eq.s32.totalorder %s22, 0
      %p43 = por %p41, %p42
      %p44 = scmp.ne.s32.totalorder %s30, %s31
      %p45 = scmp.eq.s32.totalorder %s23, 1
      %p46 = por %p44, %p45
      %p48 = scmp.ne.s32.totalorder %s31, %s47
      %p49 = scmp.eq.s32.totalorder %s23, 0
      %p50 = por %p48, %p49
      %s52 = sadd.s32 %s51, 1
      %p55 = scmp.eq.s32.totalorder %s17, 1
      %p56 = scmp.ne.s32.totalorder %s51, %s53
      %p57 = scmp.eq.s32.totalorder %s17, 0
      %p58 = por %p56, %p57
      %p59 = scmp.ne.s32.totalorder %s51, %s53
      %p60 = scmp.eq.s32.totalorder %s22, 1
      %p61 = por %p59, %p60
      %p62 = scmp.ne.s32.totalorder %s53, %s54
      %p63 = scmp.eq.s32.totalorder %s22, 0
      %p64 = por %p62, %p63
      %p65 = scmp.ne.s32.totalorder %s53, %s54
      %p66 = scmp.eq.s32.totalorder %s23, 1
      %p67 = por %p65, %p66
      %p69 = scmp.ne.s32.totalorder %s54, %s68
      %p70 = scmp.eq.s32.totalorder %s23, 0
      %p71 = por %p69, %p70
      %s73 = sadd.s32 %s72, 1
      %p76 = scmp.eq.s32.totalorder %s17, 1
      %p77 = scmp.ne.s32.totalorder %s72, %s74
      %p78 = scmp.eq.s32.totalorder %s17, 0
      %p79 = por %p77, %p78
      %p80 = scmp.ne.s32.totalorder %s72, %s74
      %p81 = scmp.eq.s32.totalorder %s22, 1
      %p82 = por %p80, %p81
      %p83 = scmp.ne.s32.totalorder %s74, %s75
      %p84 = scmp.eq.s32.totalorder %s22, 0
      %p85 = por %p83, %p84
      %p86 = scmp.ne.s32.totalorder %s74, %s75
      %p87 = scmp.eq.s32.totalorder %s23, 1
      %p88 = por %p86, %p87
      %p90 = scmp.ne.s32.totalorder %s75, %s89
      %p91 = scmp.eq.s32.totalorder %s23, 0
      %p92 = por %p90, %p91
      %s94 = sadd.s32 %s93, 1
      %p97 = scmp.eq.s32.totalorder %s17, 1
      %p98 = scmp.ne.s32.totalorder %s93, %s95
      %p99 = scmp.eq.s32.totalorder %s17, 0
      %p100 = por %p98, %p99
      %p101 = scmp.ne.s32.totalorder %s93, %s95
      %p102 = scmp.eq.s32.totalorder %s22, 1
      %p103 = por %p101, %p102
      %p104 = scmp.ne.s32.totalorder %s95, %s96
      %p105 = scmp.eq.s32.totalorder %s22, 0
      %p106 = por %p104, %p105
      %p107 = scmp.ne.s32.totalorder %s95, %s96
      %p108 = scmp.eq.s32.totalorder %s23, 1
      %p109 = por %p107, %p108
      %p111 = scmp.ne.s32.totalorder %s96, %s110
      %p112 = scmp.eq.s32.totalorder %s23, 0
      %p113 = por %p111, %p112
      %s114 = ssub.s32 %s17, %s24
      %p115 = scmp.eq.s32.totalorder %s114, 0
      %s117 = sadd.s32 %s116, 1
      %s118 = scalar_select %p115, %s116, %s117
      %p121 = pneg %p115
      %p122 = scmp.eq.s32.totalorder %s17, 1
      %p123 = por %p121, %p122
      %p124 = scmp.ne.s32.totalorder %s116, %s119
      %p125 = scmp.eq.s32.totalorder %s17, 0
      %p126 = por %p124, %p125
      %p127 = scmp.ne.s32.totalorder %s116, %s119
      %p128 = scmp.eq.s32.totalorder %s22, 1
      %p129 = por %p127, %p128
      %p130 = scmp.ne.s32.totalorder %s119, %s120
      %p131 = scmp.eq.s32.totalorder %s22, 0
      %p132 = por %p130, %p131
      %p133 = scmp.ne.s32.totalorder %s119, %s120
      %p134 = scmp.eq.s32.totalorder %s23, 1
      %p135 = por %p133, %p134
      %p137 = scmp.ne.s32.totalorder %s120, %s136
      %p138 = scmp.eq.s32.totalorder %s23, 0
      %p139 = por %p137, %p138
      %p140 = scmp.le.s32.totalorder 1, %s17
      %p141 = scmp.lt.s32.totalorder %s17, 3
      %p142 = pnand %p140, %p141
      %p143 = pneg %p142
      // Predicated region
      $region9: #{tpu_custom_call.1} parent=5 // pred_check
        _
      $region10: #{tpu_custom_call.1} parent=5 // pred_check_branch
        %145 = sbr.rel (%p142) target = $region12
      $region11: #{tpu_custom_call.1} parent=5 // pred_region
        %s146 = ssub.s32 %s17, 1
        // Predicated region
        $region13: #{tpu_custom_call.1} parent=11 // pred_check
          %p147 = pneg %p64
        $region14: #{tpu_custom_call.1} parent=11 // pred_check_branch
          %149 = sbr.rel (%p147) target = $region16
        $region15: #{tpu_custom_call.1} parent=11 // pred_region
          _
        $region16: #{tpu_custom_call.1} parent=11 // pred_fallthru
          _
        // Predicated region
        $region17: #{tpu_custom_call.1} parent=11 // pred_check
          %p150 = pneg %p85
        $region18: #{tpu_custom_call.1} parent=11 // pred_check_branch
          %152 = sbr.rel (%p150) target = $region20
        $region19: #{tpu_custom_call.1} parent=11 // pred_region
          %154 = vsyncadd [#allocation10], 0
          %s156 = sshll.u32 %s2, 4
          %s157 = int_to_ptr.hbm [resolvable:$true] %s156
          %s158 = sshll.u32 [#allocation9], 4
          %s159 = int_to_ptr.vmem [resolvable:$true] %s158
          %161 = dma.hbm_to_vmem [thread:$0]  %s157, 64, %s159, [#allocation10]
        $region20: #{tpu_custom_call.1} parent=11 // pred_fallthru
          _
        // Predicated region
        $region21: #{tpu_custom_call.1} parent=11 // pred_check
          %p162 = pneg %p106
        $region22: #{tpu_custom_call.1} parent=11 // pred_check_branch
          %164 = sbr.rel (%p162) target = $region24
        $region23: #{tpu_custom_call.1} parent=11 // pred_region
          _
        $region24: #{tpu_custom_call.1} parent=11 // pred_fallthru
          _
      $region12: #{tpu_custom_call.1} parent=5 // pred_fallthru
        _
      %p165 = scmp.lt.s32.totalorder %s17, 2
      // Predicated region
      $region25: #{tpu_custom_call.1} parent=5 // pred_check
        %p166 = pneg %p165
      $region26: #{tpu_custom_call.1} parent=5 // pred_check_branch
        %168 = sbr.rel (%p166) target = $region28
      $region27: #{tpu_custom_call.1} parent=5 // pred_region
        // Predicated region
        $region29: #{tpu_custom_call.1} parent=27 // pred_check
          %p169 = pneg %p37
        $region30: #{tpu_custom_call.1} parent=27 // pred_check_branch
          %171 = sbr.rel (%p169) target = $region32
        $region31: #{tpu_custom_call.1} parent=27 // pred_region
          %s172 = sand.u32 %s27, 1
          %s173 = scalar_lea.sflag [#allocation7], %s172
          %s174 = sand.u32 %s27, 1
          %s175 = smul.addr %s174, 8
          %s176 = scalar_lea.vmem [#allocation6], %s175
          %178 = vsyncadd %s173, 0
          %s179 = smul.addr %s17, 2
          %s180 = smul.addr %s179, 4
          %s181 = scalar_lea.hbm %s0, %s180
          %s183 = sshll.u32 %s181, 4
          %s184 = int_to_ptr.hbm [resolvable:$true] %s183
          %s185 = sshll.u32 %s176, 4
          %s186 = int_to_ptr.vmem [resolvable:$true] %s185
          %188 = dma.hbm_to_vmem [thread:$0]  %s184, 128, %s186, %s173
        $region32: #{tpu_custom_call.1} parent=27 // pred_fallthru
          _
      $region28: #{tpu_custom_call.1} parent=5 // pred_fallthru
        _
      %p189 = scmp.le.s32.totalorder 1, %s17
      %p190 = scmp.lt.s32.totalorder %s17, 3
      %p191 = pnand %p189, %p190
      %p192 = pneg %p191
      // Predicated region
      $region33: #{tpu_custom_call.1} parent=5 // pred_check
        _
      $region34: #{tpu_custom_call.1} parent=5 // pred_check_branch
        %194 = sbr.rel (%p191) target = $region36
      $region35: #{tpu_custom_call.1} parent=5 // pred_region
        %s195 = ssub.s32 %s17, 1
        %s196 = sand.u32 %s30, 1
        %s197 = scalar_lea.sflag [#allocation7], %s196
        %s198 = sand.u32 %s30, 1
        %s199 = smul.addr %s198, 8
        %s200 = scalar_lea.vmem [#allocation6], %s199
        // Predicated region
        $region37: #{tpu_custom_call.1} parent=35 // pred_check
          %p201 = pneg %p43
        $region38: #{tpu_custom_call.1} parent=35 // pred_check_branch
          %203 = sbr.rel (%p201) target = $region40
        $region39: #{tpu_custom_call.1} parent=35 // pred_region
          %205 = dma.done %s197, 128
        $region40: #{tpu_custom_call.1} parent=35 // pred_fallthru
          _
        // Predicated region
        $region41: #{tpu_custom_call.1} parent=35 // pred_check
          %p206 = pneg %p85
        $region42: #{tpu_custom_call.1} parent=35 // pred_check_branch
          %208 = sbr.rel (%p206) target = $region44
        $region43: #{tpu_custom_call.1} parent=35 // pred_region
          %210 = dma.done [#allocation10], 64
        $region44: #{tpu_custom_call.1} parent=35 // pred_fallthru
          _
        %s211 = sand.u32 %s30, 1
        %s212 = scalar_lea.sflag [#allocation7], %s211
        %s213 = sand.u32 %s30, 1
        %s214 = smul.addr %s213, 8
        %s215 = scalar_lea.vmem [#allocation6], %s214
        %p216 = pneg %p43
        %p217 = pneg %p40
        %p218 = pneg %p64
        %p219 = pneg %p61
        %p220 = pneg %p85
        %p221 = pneg %p82
        %p222 = pneg %p106
        %p223 = pneg %p103
        %p224 = pneg %p132
        %p225 = pneg %p129
        %s226 = sand.u32 %s119, 1
        %s227 = scalar_lea.sflag [#allocation8], %s226
        %s228 = sand.u32 %s119, 1
        %s229 = smul.addr %s228, 16
        %s230 = scalar_lea.vmem [#allocation11], %s229
        %v232 = vlaneseq
        %v233 = vand.u32 %v232, 127
        %v234 = vadd.s32 %v233, 128
        %vm235 = vcmp.lt.s32.totalorder %v233, 0
        %v236 = vsub.s32 0, %v233
        %v237 = vsel %vm235, %v236, %v233
        %v238 = vshrl.u32 %v237, 4
        %v239 = vand.u32 %v237, 15
        %v240 = vsub.s32 0, %v239
        %v241 = vsel %vm235, %v240, %v239
        %vm242 = vcmp.lt.s32.totalorder %v234, 0
        %v243 = vsub.s32 0, %v234
        %v244 = vsel %vm242, %v243, %v234
        %v245 = vshrl.u32 %v244, 4
        %v246 = vand.u32 %v244, 15
        %v247 = vsub.s32 0, %v246
        %v248 = vsel %vm242, %v247, %v246
        %vm249 = vcmp.ne.s32.totalorder %v241, 0
        %vm250 = vcmp.ne.s32.totalorder %v248, 0
        %vm251 = vcmp.lt.s32.totalorder %v241, 0
        %vm252 = vcmp.lt.s32.totalorder %v248, 0
        %vm253 = vmand %vm251, %vm249
        %vm254 = vmand %vm252, %vm250
        %v255 = vadd.s32 %v241, 16
        %v256 = vadd.s32 %v248, 16
        %v257 = vsel %vm253, %v255, %v241
        %v258 = vsel %vm254, %v256, %v248
        %vm259 = vcmp.ne.s32.totalorder %v257, 0
        %vm260 = vcmp.ne.s32.totalorder %v258, 0
        %vm261 = vcmp.ne.s32.totalorder %v257, 15
        %vm262 = vcmp.ne.s32.totalorder %v258, 15
        %v263 = vld [vmem:[%s200] sm:$0xff]
        %vm264 = vcmask 134144
        %265 = vst.msk [vmem:[#allocation2] sm:$0xf] %vm264, 0.0
        %vm266 = vcmask 273544
        %267 = vst.msk [vmem:[#allocation2 + $0x8] sm:$0xf] %vm266, 0.0
        %269 = vrot.lane.b32.xlu0 %v263, 17
        %v270 = vpop.permute.xlu0 %269
        %v271 = vrot.slane %v270, 4
        %vm272 = vcmask 138240
        %v273 = vsel %vm272, %v271, %v270
        %vm276 = vcmask 1043592
        %vm277 = vcmask 1047556
        %vm278 = vmor %vm277, %vm276
        %279 = vst.msk [vmem:[#allocation2] sm:$0xff] %vm278, %v273
        %280 = vst.msk [vmem:[#allocation2 + $0x8] sm:$0xf] %vm264, %v271
        %v281 = vld [vmem:[#allocation2] sm:$0xff]
        %v282 = vsel %vm259, 1, 0
        %v283 = vsel %vm260, 1, 0
        %vm284 = vcmp.eq.s32.totalorder %v282, 1
        %vm285 = vcmp.eq.s32.totalorder %v283, 1
        %287 = vst [vmem:[#allocation1] ss:$2 sm:$0xff] %v281
        %v288 = vld.sshfl [vmem:[#allocation1] sm:$0xff pattern:$0x75316420]
        %v289 = vld.sshfl [vmem:[#allocation1 + $0x8] sm:$0xff pattern:$0x75316420]
        %v292 = vsel %vm284, %v288, 0.0
        %v293 = vsel %vm285, %v289, 0.0
        %294 = vst [vmem:[#allocation4] sm:$0xf] %v292
        %295 = vst [vmem:[#allocation4 + $0x8] sm:$0xf] %v293
        %v296 = vld [vmem:[#allocation2] sm:$0xff]
        %v297 = vld [vmem:[#allocation2 + $0x8] sm:$0xf]
        %s300 = scalar_lea.vmem [#allocation1], 1
        %301 = vst [vmem:[%s300] ss:$2 sm:$0xff] %v296
        %s302 = scalar_lea.vmem [#allocation1], 17
        %303 = vst [vmem:[%s302] ss:$2 sm:$0xff] %v297
        %v304 = vld.sshfl [vmem:[#allocation1] sm:$0xff pattern:$0x75316420]
        %v305 = vld.sshfl [vmem:[#allocation1 + $0x8] sm:$0xff pattern:$0x75316420]
        %v306 = vld.sshfl [vmem:[#allocation1 + $0x10] sm:$0xff pattern:$0x75316420]
        %307 = vrot.lane.b32.xlu0 %v304, 127
        %v308 = vpop.permute.xlu0 %307
        %309 = vrot.lane.b32.xlu0 %v305, 127
        %v310 = vpop.permute.xlu0 %309
        %311 = vrot.lane.b32.xlu0 %v306, 127
        %v312 = vpop.permute.xlu0 %311
        %vm313 = vcmask 1039360
        %v314 = vsel %vm313, %v308, %v310
        %v315 = vsel %vm313, %v310, %v312
        %318 = vst [vmem:[#allocation4] sm:$0xf0] %v314
        %319 = vst [vmem:[#allocation4 + $0x8] sm:$0xf0] %v315
        %v320 = vld [vmem:[#allocation2] sm:$0xff]
        %v321 = vld [vmem:[#allocation2 + $0x8] sm:$0xf]
        %v322 = vsel %vm261, 1, 0
        %v323 = vsel %vm262, 1, 0
        %vm324 = vcmp.eq.s32.totalorder %v322, 1
        %vm325 = vcmp.eq.s32.totalorder %v323, 1
        %328 = vst [vmem:[#allocation1] ss:$2 sm:$0xff] %v320
        %s329 = scalar_lea.vmem [#allocation1], 16
        %330 = vst [vmem:[%s329] ss:$2 sm:$0xff] %v321
        %v331 = vld.sshfl [vmem:[#allocation1] sm:$0xff pattern:$0x75316420]
        %v332 = vld.sshfl [vmem:[#allocation1 + $0x8] sm:$0xff pattern:$0x75316420]
        %v333 = vld.sshfl [vmem:[#allocation1 + $0x10] sm:$0xff pattern:$0x75316420]
        %334 = vrot.lane.b32.xlu0 %v331, 126
        %v335 = vpop.permute.xlu0 %334
        %336 = vrot.lane.b32.xlu0 %v332, 126
        %v337 = vpop.permute.xlu0 %336
        %338 = vrot.lane.b32.xlu0 %v333, 126
        %v339 = vpop.permute.xlu0 %338
        %vm340 = vcmask 1031168
        %v341 = vsel %vm340, %v335, %v337
        %v342 = vsel %vm340, %v337, %v339
        %v345 = vsel %vm324, %v341, 0.0
        %v346 = vsel %vm325, %v342, 0.0
        %347 = vst [vmem:[#allocation4 + $0x10] sm:$0xf] %v345
        %348 = vst [vmem:[#allocation4 + $0x18] sm:$0xf] %v346
        %v349 = vld [vmem:[#allocation2] sm:$0xff]
        %v350 = vld [vmem:[#allocation2 + $0x8] sm:$0xf]
        %353 = vst [vmem:[#allocation1] ss:$2 sm:$0xff] %v349
        %s354 = scalar_lea.vmem [#allocation1], 16
        %355 = vst [vmem:[%s354] ss:$2 sm:$0xff] %v350
        %v356 = vld.sshfl [vmem:[#allocation1] sm:$0xff pattern:$0x75316420]
        %v357 = vld.sshfl [vmem:[#allocation1 + $0x8] sm:$0xff pattern:$0x75316420]
        %v358 = vld.sshfl [vmem:[#allocation1 + $0x10] sm:$0xff pattern:$0x75316420]
        %359 = vrot.lane.b32.xlu0 %v356, 112
        %v360 = vpop.permute.xlu0 %359
        %361 = vrot.lane.b32.xlu0 %v357, 112
        %v362 = vpop.permute.xlu0 %361
        %363 = vrot.lane.b32.xlu0 %v358, 112
        %v364 = vpop.permute.xlu0 %363
        %vm365 = vcmask 916480
        %v366 = vsel %vm365, %v360, %v362
        %v367 = vsel %vm365, %v362, %v364
        %v370 = vsel %vm284, %v366, 0.0
        %v371 = vsel %vm285, %v367, 0.0
        %v374 = vrot.slane %v370, 4
        %v375 = vrot.slane %v371, 4
        %378 = vst [vmem:[#allocation4 + $0x10] sm:$0xf0] %v374
        %379 = vst [vmem:[#allocation4 + $0x18] sm:$0xf0] %v375
        %v380 = vld [vmem:[#allocation2] sm:$0xff]
        %v381 = vld [vmem:[#allocation2 + $0x8] sm:$0xf]
        %384 = vst [vmem:[#allocation1] ss:$2 sm:$0xff] %v380
        %s385 = scalar_lea.vmem [#allocation1], 16
        %386 = vst [vmem:[%s385] ss:$2 sm:$0xff] %v381
        %v387 = vld.sshfl [vmem:[#allocation1] sm:$0xff pattern:$0x75316420]
        %v388 = vld.sshfl [vmem:[#allocation1 + $0x8] sm:$0xff pattern:$0x75316420]
        %v389 = vld.sshfl [vmem:[#allocation1 + $0x10] sm:$0xff pattern:$0x75316420]
        %390 = vrot.lane.b32.xlu0 %v387, 111
        %v391 = vpop.permute.xlu0 %390
        %392 = vrot.lane.b32.xlu0 %v388, 111
        %v393 = vpop.permute.xlu0 %392
        %394 = vrot.lane.b32.xlu0 %v389, 111
        %v395 = vpop.permute.xlu0 %394
        %vm396 = vcmask 908288
        %v397 = vsel %vm396, %v391, %v393
        %v398 = vsel %vm396, %v393, %v395
        %401 = vst [vmem:[#allocation4 + $0x20] sm:$0xf] %v397
        %402 = vst [vmem:[#allocation4 + $0x28] sm:$0xf] %v398
        %v403 = vld [vmem:[#allocation2] sm:$0xff]
        %v404 = vld [vmem:[#allocation2 + $0x8] sm:$0xf]
        %407 = vst [vmem:[#allocation1] ss:$2 sm:$0xff] %v403
        %s408 = scalar_lea.vmem [#allocation1], 16
        %409 = vst [vmem:[%s408] ss:$2 sm:$0xff] %v404
        %v410 = vld.sshfl [vmem:[#allocation1] sm:$0xff pattern:$0x75316420]
        %v411 = vld.sshfl [vmem:[#allocation1 + $0x8] sm:$0xff pattern:$0x75316420]
        %v412 = vld.sshfl [vmem:[#allocation1 + $0x10] sm:$0xff pattern:$0x75316420]
        %413 = vrot.lane.b32.xlu0 %v410, 110
        %v414 = vpop.permute.xlu0 %413
        %415 = vrot.lane.b32.xlu0 %v411, 110
        %v416 = vpop.permute.xlu0 %415
        %417 = vrot.lane.b32.xlu0 %v412, 110
        %v418 = vpop.permute.xlu0 %417
        %vm419 = vcmask 900096
        %v420 = vsel %vm419, %v414, %v416
        %v421 = vsel %vm419, %v416, %v418
        %v424 = vsel %vm324, %v420, 0.0
        %v425 = vsel %vm325, %v421, 0.0
        %v428 = vrot.slane %v424, 4
        %v429 = vrot.slane %v425, 4
        %432 = vst [vmem:[#allocation4 + $0x20] sm:$0xf0] %v428
        %433 = vst [vmem:[#allocation4 + $0x28] sm:$0xf0] %v429
        %v434 = vld [vmem:[#allocation2] sm:$0xff]
        %v435 = vld [vmem:[#allocation2 + $0x8] sm:$0xf]
        %438 = vst [vmem:[#allocation1] ss:$2 sm:$0xff] %v434
        %s439 = scalar_lea.vmem [#allocation1], 16
        %440 = vst [vmem:[%s439] ss:$2 sm:$0xff] %v435
        %v441 = vld.sshfl [vmem:[#allocation1] sm:$0xff pattern:$0x75316420]
        %v442 = vld.sshfl [vmem:[#allocation1 + $0x8] sm:$0xff pattern:$0x75316420]
        %v443 = vld.sshfl [vmem:[#allocation1 + $0x10] sm:$0xff pattern:$0x75316420]
        %444 = vrot.lane.b32.xlu0 %v441, 96
        %v445 = vpop.permute.xlu0 %444
        %446 = vrot.lane.b32.xlu0 %v442, 96
        %v447 = vpop.permute.xlu0 %446
        %448 = vrot.lane.b32.xlu0 %v443, 96
        %v449 = vpop.permute.xlu0 %448
        %vm450 = vcmask 785408
        %v451 = vsel %vm450, %v445, %v447
        %v452 = vsel %vm450, %v447, %v449
        %v455 = vsel %vm284, %v451, 0.0
        %v456 = vsel %vm285, %v452, 0.0
        %457 = vst [vmem:[#allocation4 + $0x30] sm:$0xf] %v455
        %458 = vst [vmem:[#allocation4 + $0x38] sm:$0xf] %v456
        %v459 = vld [vmem:[#allocation2] sm:$0xff]
        %v460 = vld [vmem:[#allocation2 + $0x8] sm:$0xf]
        %s463 = scalar_lea.vmem [#allocation1], 1
        %464 = vst [vmem:[%s463] ss:$2 sm:$0xff] %v459
        %s465 = scalar_lea.vmem [#allocation1], 17
        %466 = vst [vmem:[%s465] ss:$2 sm:$0xff] %v460
        %v467 = vld.sshfl [vmem:[#allocation1] sm:$0xff pattern:$0x75316420]
        %v468 = vld.sshfl [vmem:[#allocation1 + $0x8] sm:$0xff pattern:$0x75316420]
        %v469 = vld.sshfl [vmem:[#allocation1 + $0x10] sm:$0xff pattern:$0x75316420]
        %470 = vrot.lane.b32.xlu0 %v467, 95
        %v471 = vpop.permute.xlu0 %470
        %472 = vrot.lane.b32.xlu0 %v468, 95
        %v473 = vpop.permute.xlu0 %472
        %474 = vrot.lane.b32.xlu0 %v469, 95
        %v475 = vpop.permute.xlu0 %474
        %vm476 = vcmask 777216
        %v477 = vsel %vm476, %v471, %v473
        %v478 = vsel %vm476, %v473, %v475
        %481 = vst [vmem:[#allocation4 + $0x30] sm:$0xf0] %v477
        %482 = vst [vmem:[#allocation4 + $0x38] sm:$0xf0] %v478
        %v483 = vld [vmem:[#allocation2] sm:$0xff]
        %v484 = vld [vmem:[#allocation2 + $0x8] sm:$0xf]
        %487 = vst [vmem:[#allocation1] ss:$2 sm:$0xff] %v483
        %s488 = scalar_lea.vmem [#allocation1], 16
        %489 = vst [vmem:[%s488] ss:$2 sm:$0xff] %v484
        %v490 = vld.sshfl [vmem:[#allocation1] sm:$0xff pattern:$0x75316420]
        %v491 = vld.sshfl [vmem:[#allocation1 + $0x8] sm:$0xff pattern:$0x75316420]
        %v492 = vld.sshfl [vmem:[#allocation1 + $0x10] sm:$0xff pattern:$0x75316420]
        %493 = vrot.lane.b32.xlu0 %v490, 94
        %v494 = vpop.permute.xlu0 %493
        %495 = vrot.lane.b32.xlu0 %v491, 94
        %v496 = vpop.permute.xlu0 %495
        %497 = vrot.lane.b32.xlu0 %v492, 94
        %v498 = vpop.permute.xlu0 %497
        %vm499 = vcmask 769024
        %v500 = vsel %vm499, %v494, %v496
        %v501 = vsel %vm499, %v496, %v498
        %v504 = vsel %vm324, %v500, 0.0
        %v505 = vsel %vm325, %v501, 0.0
        %506 = vst [vmem:[#allocation4 + $0x40] sm:$0xf] %v504
        %507 = vst [vmem:[#allocation4 + $0x48] sm:$0xf] %v505
        %v508 = vld [vmem:[%s1] sm:$0xf]
        %v509 = vld [vmem:[#allocation4] sm:$0xff]
        %v510 = vld [vmem:[#allocation4 + $0x8] sm:$0xff]
        %v511 = vld [vmem:[#allocation4 + $0x10] sm:$0xff]
        %v512 = vld [vmem:[#allocation4 + $0x18] sm:$0xff]
        %v513 = vld [vmem:[#allocation4 + $0x20] sm:$0xff]
        %v514 = vld [vmem:[#allocation4 + $0x28] sm:$0xff]
        %v515 = vld [vmem:[#allocation4 + $0x30] sm:$0xff]
        %v516 = vld [vmem:[#allocation4 + $0x38] sm:$0xff]
        %v517 = vld [vmem:[#allocation4 + $0x40] sm:$0xf]
        %v518 = vld [vmem:[#allocation4 + $0x48] sm:$0xf]
        %v519 = vpack.c.bf16 %v511, %v509
        %v520 = vpack.c.bf16 %v512, %v510
        %v521 = vpack.c.bf16 %v515, %v513
        %v522 = vpack.c.bf16 %v516, %v514
        %v523 = vpack.c.bf16 %v517, %v517
        %v524 = vpack.c.bf16 %v518, %v518
        %vm525 = vcmask 293888
        %v527 = vsel %vm525, %v508, 0
        %vm529 = vcmask 1041408
        %v531 = vsel %vm529, %v523, 0
        %v534 = vsel %vm529, %v524, 0
        %536 = vmatpush.bf16.msra.mxu0 0
        %537 = vmatpush.bf16.msra.mxu0 0
        %538 = vmatpush.bf16.msra.mxu0 0
        %539 = vmatpush.bf16.msra.mxu0 0
        %540 = vmatpush.bf16.msra.mxu0 0
        %541 = vmatpush.bf16.msra.mxu0 %v531
        %542 = vmatpush.bf16.msra.mxu0 %v521
        %543 = vmatpush.bf16.msra.mxu0 %v519
        %544 = vmatmul.bf16.gmra.mxu0 %v527
        %v545 = vpop.f32.mrf.mxu0
        %v546 = vadd.f32 0.0, %v545
        %v547 = vpop.f32.mrf.mxu0
        %548 = vdwg.mxu0
        %549 = vmatpush.bf16.msra.mxu0 0
        %550 = vmatpush.bf16.msra.mxu0 0
        %551 = vmatpush.bf16.msra.mxu0 0
        %552 = vmatpush.bf16.msra.mxu0 0
        %553 = vmatpush.bf16.msra.mxu0 0
        %554 = vmatpush.bf16.msra.mxu0 %v534
        %555 = vmatpush.bf16.msra.mxu0 %v522
        %556 = vmatpush.bf16.msra.mxu0 %v520
        %557 = vmatmul.bf16.gmra.mxu0 %v527
        %v558 = vpop.f32.mrf.mxu0
        %v559 = vadd.f32 0.0, %v558
        %v560 = vpop.f32.mrf.mxu0
        %561 = vdwg.mxu0
        %v562 = vadd.f32 %v546, %v559
        %563 = vadd.xlane.f32.xlu0 %v562
        %v564 = vpop.xlane.xlu0 %563
        %v565 = vmul.f32 %v564, 0.00390625
        %v566 = vmul.f32 %v546, %v546
        %v567 = vmul.f32 %v559, %v559
        %v568 = vadd.f32 %v566, %v567
        %569 = vadd.xlane.f32.xlu0 %v568
        %v570 = vpop.xlane.xlu0 %569
        %v571 = vmul.f32 %v570, 0.00390625
        %v572 = vmul.f32 %v565, %v565
        %v573 = vsub.f32 %v571, %v572
        %v574 = vmax.f32 %v573, 0.0
        %v575 = vsub.f32 %v546, %v565
        %v576 = vsub.f32 %v559, %v565
        %v577 = vadd.f32 %v574, 1e-05
        %v578 = vrsqrt.pop %v577
        %v579 = vmul.f32 %v578, %v577
        %v580 = vmul.f32 %v579, %v578
        %v581 = vmul.f32 0.5, %v580
        %v582 = vsub.f32 1.5, %v581
        %v583 = vmul.f32 %v578, %v582
        %vm584 = vweird.f32 %v577
        %vm585 = vweird.f32 %v578
        %vm586 = vmor %vm584, %vm585
        %v587 = vsel %vm586, %v578, %v583
        %v588 = vmul.f32 %v575, %v587
        %v589 = vmul.f32 %v576, %v587
        %vm590 = vcmp.gt.f32.partialorder %v588, 0.0
        %vm591 = vcmp.gt.f32.partialorder %v589, 0.0
        %v592 = vmul.f32 %v588, 0.2
        %v593 = vmul.f32 %v589, 0.2
        %v594 = vsel %vm590, %v588, %v592
        %v595 = vsel %vm591, %v589, %v593
        %596 = vst.msk [vmem:[#allocation3] sm:$0xff] %vm272, 0.0
        %vm597 = vcmask 277640
        %598 = vst.msk [vmem:[#allocation3 + $0x10] sm:$0xff] %vm597, 0.0
        %601 = vrot.lane.b32.xlu0 %v594, 17
        %v602 = vpop.permute.xlu0 %601
        %603 = vrot.lane.b32.xlu0 %v595, 17
        %v604 = vpop.permute.xlu0 %603
        %v605 = vsel %vm272, %v602, %v604
        %vm609 = vcmask 1047688
        %610 = vst.msk [vmem:[#allocation3] sm:$0xff] %vm609, %v602
        %611 = vst [vmem:[#allocation3 + $0x8] sm:$0xff] %v605
        %612 = vst.msk [vmem:[#allocation3 + $0x10] sm:$0xff] %vm272, %v604
        %v613 = vld [vmem:[#allocation3] sm:$0xff]
        %v614 = vld [vmem:[#allocation3 + $0x8] sm:$0xff]
        %v615 = vsel %vm284, %v613, 0.0
        %v616 = vsel %vm285, %v614, 0.0
        %617 = vst [vmem:[#allocation5] sm:$0xff] %v615
        %618 = vst [vmem:[#allocation5 + $0x8] sm:$0xff] %v616
        %v619 = vld [vmem:[#allocation3] sm:$0xff]
        %v620 = vld [vmem:[#allocation3 + $0x8] sm:$0xff]
        %v621 = vld [vmem:[#allocation3 + $0x10] sm:$0xff]
        %625 = vrot.lane.b32.xlu0 %v619, 127
        %v626 = vpop.permute.xlu0 %625
        %627 = vrot.lane.b32.xlu0 %v620, 127
        %v628 = vpop.permute.xlu0 %627
        %629 = vrot.lane.b32.xlu0 %v621, 127
        %v630 = vpop.permute.xlu0 %629
        %v631 = vsel %vm313, %v626, %v628
        %v632 = vsel %vm313, %v628, %v630
        %635 = vst [vmem:[#allocation5 + $0x10] sm:$0xff] %v631
        %636 = vst [vmem:[#allocation5 + $0x18] sm:$0xff] %v632
        %v637 = vld [vmem:[#allocation3] sm:$0xff]
        %v638 = vld [vmem:[#allocation3 + $0x8] sm:$0xff]
        %v639 = vld [vmem:[#allocation3 + $0x10] sm:$0xff]
        %643 = vrot.lane.b32.xlu0 %v637, 126
        %v644 = vpop.permute.xlu0 %643
        %645 = vrot.lane.b32.xlu0 %v638, 126
        %v646 = vpop.permute.xlu0 %645
        %647 = vrot.lane.b32.xlu0 %v639, 126
        %v648 = vpop.permute.xlu0 %647
        %v649 = vsel %vm340, %v644, %v646
        %v650 = vsel %vm340, %v646, %v648
        %v653 = vsel %vm324, %v649, 0.0
        %v654 = vsel %vm325, %v650, 0.0
        %655 = vst [vmem:[#allocation5 + $0x20] sm:$0xff] %v653
        %656 = vst [vmem:[#allocation5 + $0x28] sm:$0xff] %v654
        %v657 = vld [vmem:[#allocation3] sm:$0xff]
        %v658 = vld [vmem:[#allocation3 + $0x8] sm:$0xff]
        %v659 = vld [vmem:[#allocation3 + $0x10] sm:$0xff]
        %663 = vrot.lane.b32.xlu0 %v657, 112
        %v664 = vpop.permute.xlu0 %663
        %665 = vrot.lane.b32.xlu0 %v658, 112
        %v666 = vpop.permute.xlu0 %665
        %667 = vrot.lane.b32.xlu0 %v659, 112
        %v668 = vpop.permute.xlu0 %667
        %v669 = vsel %vm365, %v664, %v666
        %v670 = vsel %vm365, %v666, %v668
        %v673 = vsel %vm284, %v669, 0.0
        %v674 = vsel %vm285, %v670, 0.0
        %675 = vst [vmem:[#allocation5 + $0x30] sm:$0xff] %v673
        %676 = vst [vmem:[#allocation5 + $0x38] sm:$0xff] %v674
        %v677 = vld [vmem:[#allocation3] sm:$0xff]
        %v678 = vld [vmem:[#allocation3 + $0x8] sm:$0xff]
        %v679 = vld [vmem:[#allocation3 + $0x10] sm:$0xff]
        %683 = vrot.lane.b32.xlu0 %v677, 111
        %v684 = vpop.permute.xlu0 %683
        %685 = vrot.lane.b32.xlu0 %v678, 111
        %v686 = vpop.permute.xlu0 %685
        %687 = vrot.lane.b32.xlu0 %v679, 111
        %v688 = vpop.permute.xlu0 %687
        %v689 = vsel %vm396, %v684, %v686
        %v690 = vsel %vm396, %v686, %v688
        %693 = vst [vmem:[#allocation5 + $0x40] sm:$0xff] %v689
        %694 = vst [vmem:[#allocation5 + $0x48] sm:$0xff] %v690
        %v695 = vld [vmem:[#allocation3] sm:$0xff]
        %v696 = vld [vmem:[#allocation3 + $0x8] sm:$0xff]
        %v697 = vld [vmem:[#allocation3 + $0x10] sm:$0xff]
        %701 = vrot.lane.b32.xlu0 %v695, 110
        %v702 = vpop.permute.xlu0 %701
        %703 = vrot.lane.b32.xlu0 %v696, 110
        %v704 = vpop.permute.xlu0 %703
        %705 = vrot.lane.b32.xlu0 %v697, 110
        %v706 = vpop.permute.xlu0 %705
        %v707 = vsel %vm419, %v702, %v704
        %v708 = vsel %vm419, %v704, %v706
        %v711 = vsel %vm324, %v707, 0.0
        %v712 = vsel %vm325, %v708, 0.0
        %713 = vst [vmem:[#allocation5 + $0x50] sm:$0xff] %v711
        %714 = vst [vmem:[#allocation5 + $0x58] sm:$0xff] %v712
        %v715 = vld [vmem:[#allocation3] sm:$0xff]
        %v716 = vld [vmem:[#allocation3 + $0x8] sm:$0xff]
        %v717 = vld [vmem:[#allocation3 + $0x10] sm:$0xff]
        %721 = vrot.lane.b32.xlu0 %v715, 96
        %v722 = vpop.permute.xlu0 %721
        %723 = vrot.lane.b32.xlu0 %v716, 96
        %v724 = vpop.permute.xlu0 %723
        %725 = vrot.lane.b32.xlu0 %v717, 96
        %v726 = vpop.permute.xlu0 %725
        %v727 = vsel %vm450, %v722, %v724
        %v728 = vsel %vm450, %v724, %v726
        %v731 = vsel %vm284, %v727, 0.0
        %v732 = vsel %vm285, %v728, 0.0
        %733 = vst [vmem:[#allocation5 + $0x60] sm:$0xff] %v731
        %734 = vst [vmem:[#allocation5 + $0x68] sm:$0xff] %v732
        %v735 = vld [vmem:[#allocation3] sm:$0xff]
        %v736 = vld [vmem:[#allocation3 + $0x8] sm:$0xff]
        %v737 = vld [vmem:[#allocation3 + $0x10] sm:$0xff]
        %741 = vrot.lane.b32.xlu0 %v735, 95
        %v742 = vpop.permute.xlu0 %741
        %743 = vrot.lane.b32.xlu0 %v736, 95
        %v744 = vpop.permute.xlu0 %743
        %745 = vrot.lane.b32.xlu0 %v737, 95
        %v746 = vpop.permute.xlu0 %745
        %v747 = vsel %vm476, %v742, %v744
        %v748 = vsel %vm476, %v744, %v746
        %751 = vst [vmem:[#allocation5 + $0x70] sm:$0xff] %v747
        %752 = vst [vmem:[#allocation5 + $0x78] sm:$0xff] %v748
        %v753 = vld [vmem:[#allocation3] sm:$0xff]
        %v754 = vld [vmem:[#allocation3 + $0x8] sm:$0xff]
        %v755 = vld [vmem:[#allocation3 + $0x10] sm:$0xff]
        %759 = vrot.lane.b32.xlu0 %v753, 94
        %v760 = vpop.permute.xlu0 %759
        %761 = vrot.lane.b32.xlu0 %v754, 94
        %v762 = vpop.permute.xlu0 %761
        %763 = vrot.lane.b32.xlu0 %v755, 94
        %v764 = vpop.permute.xlu0 %763
        %v765 = vsel %vm499, %v760, %v762
        %v766 = vsel %vm499, %v762, %v764
        %v769 = vsel %vm324, %v765, 0.0
        %v770 = vsel %vm325, %v766, 0.0
        %771 = vst [vmem:[#allocation5 + $0x80] sm:$0xff] %v769
        %772 = vst [vmem:[#allocation5 + $0x88] sm:$0xff] %v770
        %v773 = vld [vmem:[#allocation9] sm:$0xf]
        %v774 = vld [vmem:[#allocation5] sm:$0xff]
        %v775 = vld [vmem:[#allocation5 + $0x8] sm:$0xff]
        %v776 = vld [vmem:[#allocation5 + $0x10] sm:$0xff]
        %v777 = vld [vmem:[#allocation5 + $0x18] sm:$0xff]
        %v778 = vld [vmem:[#allocation5 + $0x20] sm:$0xff]
        %v779 = vld [vmem:[#allocation5 + $0x28] sm:$0xff]
        %v780 = vld [vmem:[#allocation5 + $0x30] sm:$0xff]
        %v781 = vld [vmem:[#allocation5 + $0x38] sm:$0xff]
        %v782 = vld [vmem:[#allocation5 + $0x40] sm:$0xff]
        %v783 = vld [vmem:[#allocation5 + $0x48] sm:$0xff]
        %v784 = vld [vmem:[#allocation5 + $0x50] sm:$0xff]
        %v785 = vld [vmem:[#allocation5 + $0x58] sm:$0xff]
        %v786 = vld [vmem:[#allocation5 + $0x60] sm:$0xff]
        %v787 = vld [vmem:[#allocation5 + $0x68] sm:$0xff]
        %v788 = vld [vmem:[#allocation5 + $0x70] sm:$0xff]
        %v789 = vld [vmem:[#allocation5 + $0x78] sm:$0xff]
        %v790 = vld [vmem:[#allocation5 + $0x80] sm:$0xff]
        %v791 = vld [vmem:[#allocation5 + $0x88] sm:$0xff]
        %v792 = vpack.c.bf16 %v776, %v774
        %v793 = vpack.c.bf16 %v777, %v775
        %v794 = vpack.c.bf16 %v780, %v778
        %v795 = vpack.c.bf16 %v781, %v779
        %v796 = vpack.c.bf16 %v784, %v782
        %v797 = vpack.c.bf16 %v785, %v783
        %v798 = vpack.c.bf16 %v788, %v786
        %v799 = vpack.c.bf16 %v789, %v787
        %v800 = vpack.c.bf16 %v790, %v790
        %v801 = vpack.c.bf16 %v791, %v791
        %vm802 = vcmask 588800
        %v804 = vsel %vm802, %v773, 0
        %vm806 = vcmask 1043456
        %v808 = vsel %vm806, %v800, 0
        %v811 = vsel %vm806, %v801, 0
        %813 = vmatpush.bf16.msra.mxu0 0
        %814 = vmatpush.bf16.msra.mxu0 0
        %815 = vmatpush.bf16.msra.mxu0 0
        %816 = vmatpush.bf16.msra.mxu0 %v808
        %817 = vmatpush.bf16.msra.mxu0 %v798
        %818 = vmatpush.bf16.msra.mxu0 %v796
        %819 = vmatpush.bf16.msra.mxu0 %v794
        %820 = vmatpush.bf16.msra.mxu0 %v792
        %821 = vmatmul.bf16.gmra.mxu0 %v804
        %v822 = vpop.f32.mrf.mxu0
        %v823 = vadd.f32 0.0, %v822
        %v824 = vpop.f32.mrf.mxu0
        %825 = vdwg.mxu0
        %826 = vmatpush.bf16.msra.mxu0 0
        %827 = vmatpush.bf16.msra.mxu0 0
        %828 = vmatpush.bf16.msra.mxu0 0
        %829 = vmatpush.bf16.msra.mxu0 %v811
        %830 = vmatpush.bf16.msra.mxu0 %v799
        %831 = vmatpush.bf16.msra.mxu0 %v797
        %832 = vmatpush.bf16.msra.mxu0 %v795
        %833 = vmatpush.bf16.msra.mxu0 %v793
        %834 = vmatmul.bf16.gmra.mxu0 %v804
        %v835 = vpop.f32.mrf.mxu0
        %v836 = vadd.f32 0.0, %v835
        %v837 = vpop.f32.mrf.mxu0
        %838 = vdwg.mxu0
        %v839 = vadd.f32 %v823, %v836
        %840 = vadd.xlane.f32.xlu0 %v839
        %v841 = vpop.xlane.xlu0 %840
        %v842 = vmul.f32 %v841, 0.00390625
        %v843 = vmul.f32 %v823, %v823
        %v844 = vmul.f32 %v836, %v836
        %v845 = vadd.f32 %v843, %v844
        %846 = vadd.xlane.f32.xlu0 %v845
        %v847 = vpop.xlane.xlu0 %846
        %v848 = vmul.f32 %v847, 0.00390625
        %v849 = vmul.f32 %v842, %v842
        %v850 = vsub.f32 %v848, %v849
        %v851 = vmax.f32 %v850, 0.0
        %v852 = vsub.f32 %v823, %v842
        %v853 = vsub.f32 %v836, %v842
        %v854 = vadd.f32 %v851, 1e-05
        %v855 = vrsqrt.pop %v854
        %v856 = vmul.f32 %v855, %v854
        %v857 = vmul.f32 %v856, %v855
        %v858 = vmul.f32 0.5, %v857
        %v859 = vsub.f32 1.5, %v858
        %v860 = vmul.f32 %v855, %v859
        %vm861 = vweird.f32 %v854
        %vm862 = vweird.f32 %v855
        %vm863 = vmor %vm861, %vm862
        %v864 = vsel %vm863, %v855, %v860
        %v865 = vmul.f32 %v852, %v864
        %v866 = vmul.f32 %v853, %v864
        %vm867 = vcmp.gt.f32.partialorder %v865, 0.0
        %vm868 = vcmp.gt.f32.partialorder %v866, 0.0
        %v869 = vmul.f32 %v865, 0.2
        %v870 = vmul.f32 %v866, 0.2
        %v871 = vsel %vm867, %v865, %v869
        %v872 = vsel %vm868, %v866, %v870
        %v873 = vld [vmem:[%s3] sm:$0xf]
        %874 = vst [vmem:[#allocation1] ss:$2 sm:$0xff] %v263
        %v875 = vld.sshfl [vmem:[#allocation1] sm:$0xff pattern:$0x75316420]
        %v876 = vld.sshfl [vmem:[#allocation1 + $0x8] sm:$0xff pattern:$0x75316420]
        %v879 = vpack.c.bf16 %v875, %v875
        %v880 = vpack.c.bf16 %v876, %v876
        %vm881 = vcmask 31744
        %v883 = vsel %vm881, %v873, 0
        %v886 = vsel %vm529, %v879, 0
        %v889 = vsel %vm529, %v880, 0
        %891 = vmatpush.bf16.msra.mxu0 0
        %892 = vmatpush.bf16.msra.mxu0 0
        %893 = vmatpush.bf16.msra.mxu0 0
        %894 = vmatpush.bf16.msra.mxu0 0
        %895 = vmatpush.bf16.msra.mxu0 0
        %896 = vmatpush.bf16.msra.mxu0 0
        %897 = vmatpush.bf16.msra.mxu0 0
        %898 = vmatpush.bf16.msra.mxu0 %v886
        %899 = vmatmul.bf16.gmra.mxu0 %v883
        %v900 = vpop.f32.mrf.mxu0
        %v901 = vadd.f32 0.0, %v900
        %v902 = vpop.f32.mrf.mxu0
        %903 = vdwg.mxu0
        %904 = vmatpush.bf16.msra.mxu0 0
        %905 = vmatpush.bf16.msra.mxu0 0
        %906 = vmatpush.bf16.msra.mxu0 0
        %907 = vmatpush.bf16.msra.mxu0 0
        %908 = vmatpush.bf16.msra.mxu0 0
        %909 = vmatpush.bf16.msra.mxu0 0
        %910 = vmatpush.bf16.msra.mxu0 0
        %911 = vmatpush.bf16.msra.mxu0 %v889
        %912 = vmatmul.bf16.gmra.mxu0 %v883
        %v913 = vpop.f32.mrf.mxu0
        %v914 = vadd.f32 0.0, %v913
        %v915 = vpop.f32.mrf.mxu0
        %916 = vdwg.mxu0
        %v917 = vadd.f32 %v871, %v901
        %v918 = vadd.f32 %v872, %v914
        %vm919 = vcmp.gt.f32.partialorder %v917, 0.0
        %vm920 = vcmp.gt.f32.partialorder %v918, 0.0
        %v921 = vmul.f32 %v917, 0.2
        %v922 = vmul.f32 %v918, 0.2
        %v923 = vsel %vm919, %v917, %v921
        %v924 = vsel %vm920, %v918, %v922
        %925 = vst [vmem:[%s230] sm:$0xff] %v923
        %926 = vst [vmem:[%s230 + $0x8] sm:$0xff] %v924
        %s927 = sand.u32 %s119, 1
        %s928 = scalar_lea.sflag [#allocation8], %s927
        %s929 = sand.u32 %s119, 1
        %s930 = smul.addr %s929, 16
        %s931 = scalar_lea.vmem [#allocation11], %s930
        // Predicated region
        $region45: #{tpu_custom_call.1} parent=35 // pred_check
          %p932 = pneg %p129
        $region46: #{tpu_custom_call.1} parent=35 // pred_check_branch
          %934 = sbr.rel (%p932) target = $region48
        $region47: #{tpu_custom_call.1} parent=35 // pred_region
          %936 = vsyncadd %s928, 0
          %s937 = smul.addr %s22, 2
          %s938 = smul.addr %s937, 8
          %s939 = scalar_lea.hbm %s4, %s938
          %s941 = sshll.u32 %s931, 4
          %s942 = int_to_ptr.vmem [resolvable:$true] %s941
          %s943 = sshll.u32 %s939, 4
          %s944 = int_to_ptr.hbm [resolvable:$true] %s943
          %946 = dma.vmem_to_hbm [thread:$0]  %s942, 256, %s944, %s928
        $region48: #{tpu_custom_call.1} parent=35 // pred_fallthru
          _
      $region36: #{tpu_custom_call.1} parent=5 // pred_fallthru
        _
      %p947 = scmp.le.s32.totalorder 2, %s17
      // Predicated region
      $region49: #{tpu_custom_call.1} parent=5 // pred_check
        %p948 = pneg %p947
      $region50: #{tpu_custom_call.1} parent=5 // pred_check_branch
        %950 = sbr.rel (%p948) target = $region52
      $region51: #{tpu_custom_call.1} parent=5 // pred_region
        %s951 = ssub.s32 %s17, 2
        // Predicated region
        $region53: #{tpu_custom_call.1} parent=51 // pred_check
          %p952 = pneg %p135
        $region54: #{tpu_custom_call.1} parent=51 // pred_check_branch
          %954 = sbr.rel (%p952) target = $region56
        $region55: #{tpu_custom_call.1} parent=51 // pred_region
          %s955 = sand.u32 %s120, 1
          %s956 = scalar_lea.sflag [#allocation8], %s955
          %s957 = sand.u32 %s120, 1
          %s958 = smul.addr %s957, 16
          %s959 = scalar_lea.vmem [#allocation11], %s958
          %961 = dma.done %s956, 256
        $region56: #{tpu_custom_call.1} parent=51 // pred_fallthru
          _
      $region52: #{tpu_custom_call.1} parent=5 // pred_fallthru
        _
    $region6: #{tpu_custom_call.1} parent=1 // loop_footer
      %s21 = sadd.s32 1, %s17
    $region7: #{tpu_custom_call.1} parent=1 // loop_footer_branch
      %16 = sbr.rel target = $region3
    $region8: #{tpu_custom_call.1} parent=1 // loop_exit
      _
    %962 = vsyncpa [#allocation7], 1
    %s963 = scalar_lea.sflag [#allocation7], 1
    %964 = vsyncpa %s963, 1
    %965 = vsyncpa [#allocation10], 1
    %966 = vsyncpa [#allocation8], 1
    %s967 = scalar_lea.sflag [#allocation8], 1
    %968 = vsyncpa %s967, 1

</llo_original>
